<compile_context>
chip_gen: v5e
topology: v5e:2x2
jax: 0.10.0
libtpu: 0.0.40
codegen_flags: <defaults>
</compile_context>

<pallas_src>
import functools

import jax
import jax.numpy as jnp
from jax.experimental import pallas as pl
from jax.experimental.pallas import tpu as pltpu

_LANE = 128


def _round_up(x, m):
    return ((x + m - 1) // m) * m


def _pad2d(x, rows, cols):
    r, c = x.shape
    if r == rows and c == cols:
        return x
    return jnp.pad(x, ((0, rows - r), (0, cols - c)))


def _as_dtype(x, dt):
    return x if x.dtype == dt else x.astype(dt)


def _sage_kernel(x_ref, a_ref, w_ref, b_ref, o_ref, h_a, h_b, *, tm, n_layers):
    """One (layer, row-stripe) grid step of the fused GraphSAGE forward.

    x_ref : (N_pad, F) bf16, full-resident input features.
    a_ref : (TM, N_pad) bf16, 0/1 adjacency row stripe (pipelined per step).
    w_ref : (1, 2F, F) bf16, current layer's stacked [W_self ; W_neigh].
    b_ref : (1, 1, F) f32, current layer's bias.
    o_ref : (N_pad, F) f32, full-resident output (written on the last layer).
    h_a/h_b: (N_pad, F) bf16 VMEM scratch, ping-pong inter-layer activations.
    """
    layer = pl.program_id(0)
    r = pl.program_id(1)
    row0 = pl.multiple_of(r * tm, tm)

    a_stripe = a_ref[...]                                    # (TM, N_pad) bf16, 0/1
    # Exact in-degree of this row stripe (full row is present), mean scale in f32.
    deg = jnp.sum(a_stripe.astype(jnp.float32), axis=-1, keepdims=True)
    inv_d = 1.0 / jnp.maximum(deg, 1.0)                      # (TM, 1) f32

    w = w_ref[0]                                             # (2F, F) bf16
    b = b_ref[0]                                             # (1, F) f32

    def layer_step(src_ref, dst_ref, final):
        h_full = src_ref[...]                                # (N_pad, F) bf16
        h_stripe = src_ref[pl.ds(row0, tm), :]               # (TM, F) bf16
        # Aggregate neighbors (f32 accumulation), then deferred mean scaling.
        hn = jnp.dot(a_stripe, h_full, preferred_element_type=jnp.float32)
        hn = hn * inv_d                                      # (TM, F) f32
        # Fused self+neighbor projection: one K=2F matmul on the MXU.
        lhs = jnp.concatenate([h_stripe, hn.astype(jnp.bfloat16)], axis=-1)
        out = jnp.dot(lhs, w, preferred_element_type=jnp.float32) + b
        if final:
            o_ref[pl.ds(row0, tm), :] = out.astype(o_ref.dtype)
        else:
            dst_ref[pl.ds(row0, tm), :] = jnp.maximum(out, 0.0).astype(dst_ref.dtype)

    # Layer li reads: x (li==0), else ping-pong scratch; writes the other buffer
    # (or the output on the last layer).
    for li in range(n_layers):
        src = x_ref if li == 0 else (h_a if li % 2 == 1 else h_b)
        dst = None if li == n_layers - 1 else (h_a if li % 2 == 0 else h_b)
        final = li == n_layers - 1

        @pl.when(layer == li)
        def _(src=src, dst=dst, final=final):
            layer_step(src, dst, final)


def sage_forward(adj, x, params, *, tm=128):
    """Fused multi-layer GraphSAGE ('mean') forward via a single pallas_call.

    adj: (N, N) 0/1 adjacency with adj[i, j] = 1 iff edge j -> i (any float dtype).
    x:   (N, in_feats) node features.
    params: list of (W_self, W_neigh, bias) per layer.
    tm:  row-stripe size (128 is safe everywhere; 256 is a good choice on
         v6e/v7x for large graphs).
    """
    n, in_feats = x.shape
    n_layers = len(params)
    out_feats = params[-1][0].shape[1]

    f_pad = _round_up(max([in_feats] + [w.shape[1] for (w, _, _) in params]), _LANE)
    n_pad = _round_up(max(n, tm), tm)
    r_tiles = n_pad // tm

    # Exact 0/1 adjacency in bf16 (halves the O(N^2) DMA vs f32, no rounding of
    # the mean scale, which is applied in f32 in-kernel). Pad/cast are skipped
    # when the caller already provides padded bf16 data.
    a_p = _as_dtype(_pad2d(adj, n_pad, n_pad), jnp.bfloat16)
    x_p = _as_dtype(_pad2d(x, n_pad, f_pad), jnp.bfloat16)

    # Per layer: stack [W_self ; W_neigh] along the contraction dim -> (2F, F).
    w_cat = jnp.stack([
        jnp.concatenate(
            [_pad2d(ws, f_pad, f_pad), _pad2d(wn, f_pad, f_pad)], axis=0)
        for (ws, wn, _) in params
    ]).astype(jnp.bfloat16)                                   # (L, 2F, F) bf16
    b_cat = jnp.stack([
        _pad2d(b.reshape(1, -1), 1, f_pad) for (_, _, b) in params
    ]).astype(jnp.float32)                                    # (L, 1, F) f32

    kernel = functools.partial(_sage_kernel, tm=tm, n_layers=n_layers)

    in_specs = [
        pl.BlockSpec((n_pad, f_pad), lambda l, r: (0, 0)),            # x: resident
        pl.BlockSpec((tm, n_pad), lambda l, r: (r, 0)),               # A row stripes
        pl.BlockSpec((1, 2 * f_pad, f_pad), lambda l, r: (l, 0, 0)),  # layer weight
        pl.BlockSpec((1, 1, f_pad), lambda l, r: (l, 0, 0)),          # layer bias
    ]
    out_spec = pl.BlockSpec((n_pad, f_pad), lambda l, r: (0, 0))      # resident

    # Advisory cost hint for the surrounding XLA schedule.
    flops = n_layers * (2 * n_pad * n_pad * f_pad
                        + 2 * n_pad * (2 * f_pad) * f_pad)
    bytes_accessed = (n_layers * n_pad * n_pad * 2        # A stripes, once per layer
                      + n_pad * f_pad * 2                  # x
                      + int(w_cat.size) * 2 + int(b_cat.size) * 4
                      + n_pad * f_pad * 4)                 # output
    cost = pl.CostEstimate(flops=flops, transcendentals=0,
                           bytes_accessed=bytes_accessed)

    # Generation-aware VMEM budget (fits v7x's 64 MiB per-core VMEM too).
    try:
        vmem_cap = pltpu.get_tpu_info().vmem_capacity_bytes
    except Exception:
        vmem_cap = 64 << 20
    vmem_limit = min(int(vmem_cap * 3 // 4), 96 << 20)

    out_pad = pl.pallas_call(
        kernel,
        out_shape=jax.ShapeDtypeStruct((n_pad, f_pad), jnp.float32),
        grid=(n_layers, r_tiles),
        in_specs=in_specs,
        out_specs=out_spec,
        scratch_shapes=[pltpu.VMEM((n_pad, f_pad), jnp.bfloat16),
                        pltpu.VMEM((n_pad, f_pad), jnp.bfloat16)],
        compiler_params=pltpu.CompilerParams(
            # Layer axis is a true dependency chain; the row axis shares
            # per-core scratch, so both stay "arbitrary" (see TODO above).
            dimension_semantics=("arbitrary", "arbitrary"),
            vmem_limit_bytes=vmem_limit,
        ),
        cost_estimate=cost,
    )(x_p, a_p, w_cat, b_cat)

    return out_pad[:n, :out_feats]


def init_sage_params(key, in_feats, hid_feats, out_feats):
    """Deterministic init of the three SAGEConv layers' parameters."""
    dims = [(in_feats, hid_feats), (hid_feats, hid_feats), (hid_feats, out_feats)]
    params = []
    for (fi, fo) in dims:
        key, k1, k2 = jax.random.split(key, 3)
        scale = 1.0 / jnp.sqrt(jnp.float32(fi))
        w_self = jax.random.normal(k1, (fi, fo), jnp.float32) * scale
        w_neigh = jax.random.normal(k2, (fi, fo), jnp.float32) * scale
        b = jnp.zeros((fo,), jnp.float32)
        params.append((w_self, w_neigh, b))
    return params


def _reference_bf16(adj, x, params):
    """Pure-JAX mirror of the kernel's mixed-precision math (tight tolerance)."""
    deg = jnp.sum(adj.astype(jnp.float32), axis=1, keepdims=True)
    inv_d = 1.0 / jnp.maximum(deg, 1.0)
    a_bf = adj.astype(jnp.bfloat16)                       # 0/1 exact in bf16
    h = x.astype(jnp.bfloat16)
    n_layers = len(params)
    out = None
    for li, (ws, wn, b) in enumerate(params):
        hn = jnp.dot(a_bf, h, preferred_element_type=jnp.float32) * inv_d
        w = jnp.concatenate([ws, wn], axis=0).astype(jnp.bfloat16)
        lhs = jnp.concatenate([h, hn.astype(jnp.bfloat16)], axis=1)
        out = jnp.dot(lhs, w, preferred_element_type=jnp.float32) + b
        if li < n_layers - 1:
            h = jnp.maximum(out, 0.0).astype(jnp.bfloat16)
    return out


def _reference_f32(adj, x, params):
    """Pure f32 reference of the original module semantics."""
    deg = jnp.sum(adj, axis=1, keepdims=True)
    a_norm = adj / jnp.maximum(deg, 1.0)                  # mean aggregation
    h = x
    for li, (ws, wn, b) in enumerate(params):
        h = h @ ws + (a_norm @ h) @ wn + b
        if li < len(params) - 1:
            h = jnp.maximum(h, 0.0)
    return h


if __name__ == "__main__":
    key = jax.random.PRNGKey(0)
    k_graph, k_feat, k_param = jax.random.split(key, 3)

    # Small, deterministic graph + features (2 row stripes at tm=128).
    num_nodes = 200
    in_feats, hid_feats, out_feats = 8, 32, 8

    # Random directed 0/1 adjacency (no self-loops), A[i, j] = edge j -> i.
    adj = (jax.random.uniform(k_graph, (num_nodes, num_nodes)) < 0.1).astype(jnp.float32)
    adj = adj * (1.0 - jnp.eye(num_nodes, dtype=jnp.float32))

    x = jax.random.normal(k_feat, (num_nodes, in_feats), jnp.float32)
    params = init_sage_params(k_param, in_feats, hid_feats, out_feats)

    out = sage_forward(adj, x, params)
    out = jax.block_until_ready(out)
    assert out.shape == (num_nodes, out_feats)

    # Exact mirror of the fused kernel's mixed-precision math (tight tolerance).
    ref_bf16 = _reference_bf16(adj, x, params)
    assert jnp.allclose(out, ref_bf16, atol=2e-3, rtol=2e-3), "bf16 mirror mismatch"

    # Original f32 module semantics (loose tolerance to cover bf16 operands).
    ref_f32 = _reference_f32(adj, x, params)
    assert jnp.allclose(out, ref_f32, atol=5e-2, rtol=5e-2), "f32 reference mismatch"

    print("KERNEL_OK")
</pallas_src>

<mosaic_0001>
module attributes {stable_mosaic.version = 11 : i64} {
  func.func @_sage_kernel(%arg0: i32, %arg1: i32, %arg2: memref<256x128xbf16, #tpu.memory_space<vmem>>, %arg3: memref<128x256xbf16, #tpu.memory_space<vmem>>, %arg4: memref<1x256x128xbf16, #tpu.memory_space<vmem>>, %arg5: memref<1x1x128xf32, #tpu.memory_space<vmem>>, %arg6: memref<256x128xf32, #tpu.memory_space<vmem>>, %arg7: memref<256x128xbf16, #tpu.memory_space<vmem>>, %arg8: memref<256x128xbf16, #tpu.memory_space<vmem>>) attributes {dimension_semantics = [#tpu.dimension_semantics<arbitrary>, #tpu.dimension_semantics<arbitrary>], iteration_bounds = array<i64: 3, 2>, scalar_prefetch = 0 : i64, scratch_operands = 2 : i64, tpu.core_type = #tpu.core_type<tc>, window_params = [{pipeline_mode = #tpu.pipeline_mode<synchronous>, transform_indices = @transform_0, window_bounds = array<i64: 256, 128>}, {transform_indices = @transform_1, window_bounds = array<i64: 128, 256>}, {transform_indices = @transform_2, window_bounds = array<i64: 1, 256, 128>}, {transform_indices = @transform_3, window_bounds = array<i64: 1, 1, 128>}, {pipeline_mode = #tpu.pipeline_mode<synchronous>, transform_indices = @transform_4, window_bounds = array<i64: 256, 128>}]} {
    %c128_i32 = arith.constant 128 : i32
    %0 = arith.muli %arg1, %c128_i32 : i32
    %1 = tpu.assume_multiple %0, 128 : i32
    %c0 = arith.constant 0 : index
    %c0_0 = arith.constant 0 : index
    %2 = vector.load %arg3[%c0, %c0_0] : memref<128x256xbf16, #tpu.memory_space<vmem>>, vector<128x256xbf16>
    %3 = arith.extf %2 : vector<128x256xbf16> to vector<128x256xf32>
    %cst = arith.constant dense<0.000000e+00> : vector<128xf32>
    %4 = vector.multi_reduction <add>, %3, %cst [1] : vector<128x256xf32> to vector<128xf32>
    %5 = vector.shape_cast %4 : vector<128xf32> to vector<128x1xf32>
    %cst_1 = arith.constant 1.000000e+00 : f32
    %6 = vector.broadcast %cst_1 : f32 to vector<128x1xf32>
    %7 = arith.maximumf %5, %6 : vector<128x1xf32>
    %cst_2 = arith.constant 1.000000e+00 : f32
    %8 = vector.broadcast %cst_2 : f32 to vector<128x1xf32>
    %9 = arith.divf %8, %7 : vector<128x1xf32>
    %c0_3 = arith.constant 0 : index
    %c0_4 = arith.constant 0 : index
    %c0_5 = arith.constant 0 : index
    %10 = vector.load %arg4[%c0_3, %c0_4, %c0_5] : memref<1x256x128xbf16, #tpu.memory_space<vmem>>, vector<1x256x128xbf16>
    %11 = vector.shape_cast %10 : vector<1x256x128xbf16> to vector<256x128xbf16>
    %c0_6 = arith.constant 0 : index
    %c0_7 = arith.constant 0 : index
    %c0_8 = arith.constant 0 : index
    %12 = vector.load %arg5[%c0_6, %c0_7, %c0_8] : memref<1x1x128xf32, #tpu.memory_space<vmem>>, vector<1x1x128xf32>
    %13 = vector.shape_cast %12 : vector<1x1x128xf32> to vector<1x128xf32>
    %c0_i32 = arith.constant 0 : i32
    %14 = arith.cmpi eq, %arg0, %c0_i32 : i32
    %15 = arith.extui %14 : i1 to i32
    %c0_i32_9 = arith.constant 0 : i32
    %16 = arith.cmpi ne, %15, %c0_i32_9 : i32
    scf.if %16 {
      %c0_12 = arith.constant 0 : index
      %c0_13 = arith.constant 0 : index
      %23 = vector.load %arg2[%c0_12, %c0_13] : memref<256x128xbf16, #tpu.memory_space<vmem>>, vector<256x128xbf16>
      %24 = arith.index_cast %1 : i32 to index
      %c0_14 = arith.constant 0 : index
      %25 = vector.load %arg2[%24, %c0_14] : memref<256x128xbf16, #tpu.memory_space<vmem>>, vector<128x128xbf16>
      %cst_15 = arith.constant dense<0.000000e+00> : vector<128x128xf32>
      %26 = tpu.matmul %2, %23, %cst_15 {dimension_numbers = #tpu.dot_dimension_numbers<[1], [0], [0], [1], [0, 0, 1, 1], [], []>} : vector<128x256xbf16>, vector<256x128xbf16>, vector<128x128xf32> -> vector<128x128xf32>
      %27 = vector.broadcast %9 : vector<128x1xf32> to vector<128x128xf32>
      %28 = arith.mulf %26, %27 : vector<128x128xf32>
      %29 = arith.truncf %28 : vector<128x128xf32> to vector<128x128xbf16>
      %30 = tpu.concatenate %25, %29 in 1 : vector<128x128xbf16>, vector<128x128xbf16> -> vector<128x256xbf16>
      %cst_16 = arith.constant dense<0.000000e+00> : vector<128x128xf32>
      %31 = tpu.matmul %30, %11, %cst_16 {dimension_numbers = #tpu.dot_dimension_numbers<[1], [0], [0], [1], [0, 0, 1, 1], [], []>} : vector<128x256xbf16>, vector<256x128xbf16>, vector<128x128xf32> -> vector<128x128xf32>
      %32 = vector.broadcast %13 : vector<1x128xf32> to vector<128x128xf32>
      %33 = arith.addf %31, %32 : vector<128x128xf32>
      %cst_17 = arith.constant 0.000000e+00 : f32
      %34 = vector.broadcast %cst_17 : f32 to vector<128x128xf32>
      %35 = arith.maximumf %33, %34 : vector<128x128xf32>
      %36 = arith.truncf %35 : vector<128x128xf32> to vector<128x128xbf16>
      %37 = arith.index_cast %1 : i32 to index
      %c0_18 = arith.constant 0 : index
      %38 = vector.load %arg7[%37, %c0_18] : memref<256x128xbf16, #tpu.memory_space<vmem>>, vector<128x128xbf16>
      tpu.vector_store %arg7[%37, %c0_18], %36 {strides = array<i32>} : memref<256x128xbf16, #tpu.memory_space<vmem>>, vector<128x128xbf16>,
    } else {
    }
    %c1_i32 = arith.constant 1 : i32
    %17 = arith.cmpi eq, %arg0, %c1_i32 : i32
    %18 = arith.extui %17 : i1 to i32
    %c0_i32_10 = arith.constant 0 : i32
    %19 = arith.cmpi ne, %18, %c0_i32_10 : i32
    scf.if %19 {
      %c0_12 = arith.constant 0 : index
      %c0_13 = arith.constant 0 : index
      %23 = vector.load %arg7[%c0_12, %c0_13] : memref<256x128xbf16, #tpu.memory_space<vmem>>, vector<256x128xbf16>
      %24 = arith.index_cast %1 : i32 to index
      %c0_14 = arith.constant 0 : index
      %25 = vector.load %arg7[%24, %c0_14] : memref<256x128xbf16, #tpu.memory_space<vmem>>, vector<128x128xbf16>
      %cst_15 = arith.constant dense<0.000000e+00> : vector<128x128xf32>
      %26 = tpu.matmul %2, %23, %cst_15 {dimension_numbers = #tpu.dot_dimension_numbers<[1], [0], [0], [1], [0, 0, 1, 1], [], []>} : vector<128x256xbf16>, vector<256x128xbf16>, vector<128x128xf32> -> vector<128x128xf32>
      %27 = vector.broadcast %9 : vector<128x1xf32> to vector<128x128xf32>
      %28 = arith.mulf %26, %27 : vector<128x128xf32>
      %29 = arith.truncf %28 : vector<128x128xf32> to vector<128x128xbf16>
      %30 = tpu.concatenate %25, %29 in 1 : vector<128x128xbf16>, vector<128x128xbf16> -> vector<128x256xbf16>
      %cst_16 = arith.constant dense<0.000000e+00> : vector<128x128xf32>
      %31 = tpu.matmul %30, %11, %cst_16 {dimension_numbers = #tpu.dot_dimension_numbers<[1], [0], [0], [1], [0, 0, 1, 1], [], []>} : vector<128x256xbf16>, vector<256x128xbf16>, vector<128x128xf32> -> vector<128x128xf32>
      %32 = vector.broadcast %13 : vector<1x128xf32> to vector<128x128xf32>
      %33 = arith.addf %31, %32 : vector<128x128xf32>
      %cst_17 = arith.constant 0.000000e+00 : f32
      %34 = vector.broadcast %cst_17 : f32 to vector<128x128xf32>
      %35 = arith.maximumf %33, %34 : vector<128x128xf32>
      %36 = arith.truncf %35 : vector<128x128xf32> to vector<128x128xbf16>
      %37 = arith.index_cast %1 : i32 to index
      %c0_18 = arith.constant 0 : index
      %38 = vector.load %arg8[%37, %c0_18] : memref<256x128xbf16, #tpu.memory_space<vmem>>, vector<128x128xbf16>
      tpu.vector_store %arg8[%37, %c0_18], %36 {strides = array<i32>} : memref<256x128xbf16, #tpu.memory_space<vmem>>, vector<128x128xbf16>,
    } else {
    }
    %c2_i32 = arith.constant 2 : i32
    %20 = arith.cmpi eq, %arg0, %c2_i32 : i32
    %21 = arith.extui %20 : i1 to i32
    %c0_i32_11 = arith.constant 0 : i32
    %22 = arith.cmpi ne, %21, %c0_i32_11 : i32
    scf.if %22 {
      %c0_12 = arith.constant 0 : index
      %c0_13 = arith.constant 0 : index
      %23 = vector.load %arg8[%c0_12, %c0_13] : memref<256x128xbf16, #tpu.memory_space<vmem>>, vector<256x128xbf16>
      %24 = arith.index_cast %1 : i32 to index
      %c0_14 = arith.constant 0 : index
      %25 = vector.load %arg8[%24, %c0_14] : memref<256x128xbf16, #tpu.memory_space<vmem>>, vector<128x128xbf16>
      %cst_15 = arith.constant dense<0.000000e+00> : vector<128x128xf32>
      %26 = tpu.matmul %2, %23, %cst_15 {dimension_numbers = #tpu.dot_dimension_numbers<[1], [0], [0], [1], [0, 0, 1, 1], [], []>} : vector<128x256xbf16>, vector<256x128xbf16>, vector<128x128xf32> -> vector<128x128xf32>
      %27 = vector.broadcast %9 : vector<128x1xf32> to vector<128x128xf32>
      %28 = arith.mulf %26, %27 : vector<128x128xf32>
      %29 = arith.truncf %28 : vector<128x128xf32> to vector<128x128xbf16>
      %30 = tpu.concatenate %25, %29 in 1 : vector<128x128xbf16>, vector<128x128xbf16> -> vector<128x256xbf16>
      %cst_16 = arith.constant dense<0.000000e+00> : vector<128x128xf32>
      %31 = tpu.matmul %30, %11, %cst_16 {dimension_numbers = #tpu.dot_dimension_numbers<[1], [0], [0], [1], [0, 0, 1, 1], [], []>} : vector<128x256xbf16>, vector<256x128xbf16>, vector<128x128xf32> -> vector<128x128xf32>
      %32 = vector.broadcast %13 : vector<1x128xf32> to vector<128x128xf32>
      %33 = arith.addf %31, %32 : vector<128x128xf32>
      %34 = arith.index_cast %1 : i32 to index
      %c0_17 = arith.constant 0 : index
      %35 = vector.load %arg6[%34, %c0_17] : memref<256x128xf32, #tpu.memory_space<vmem>>, vector<128x128xf32>
      tpu.vector_store %arg6[%34, %c0_17], %33 {strides = array<i32>} : memref<256x128xf32, #tpu.memory_space<vmem>>, vector<128x128xf32>,
    } else {
    }
    return
  }
  func.func @transform_0(%arg0: i32, %arg1: i32) -> (i32, i32) {
    %c0_i32 = arith.constant 0 : i32
    %c0_i32_0 = arith.constant 0 : i32
    %c0_i32_1 = arith.constant 0 : i32
    return %c0_i32, %c0_i32_0 : i32, i32
  }
  func.func @transform_1(%arg0: i32, %arg1: i32) -> (i32, i32) {
    %c0_i32 = arith.constant 0 : i32
    %c0_i32_0 = arith.constant 0 : i32
    return %arg1, %c0_i32 : i32, i32
  }
  func.func @transform_2(%arg0: i32, %arg1: i32) -> (i32, i32, i32) {
    %c0_i32 = arith.constant 0 : i32
    %c0_i32_0 = arith.constant 0 : i32
    %c0_i32_1 = arith.constant 0 : i32
    return %arg0, %c0_i32, %c0_i32_0 : i32, i32, i32
  }
  func.func @transform_3(%arg0: i32, %arg1: i32) -> (i32, i32, i32) {
    %c0_i32 = arith.constant 0 : i32
    %c0_i32_0 = arith.constant 0 : i32
    %c0_i32_1 = arith.constant 0 : i32
    return %arg0, %c0_i32, %c0_i32_0 : i32, i32, i32
  }
  func.func @transform_4(%arg0: i32, %arg1: i32) -> (i32, i32) {
    %c0_i32 = arith.constant 0 : i32
    %c0_i32_0 = arith.constant 0 : i32
    %c0_i32_1 = arith.constant 0 : i32
    return %c0_i32, %c0_i32_0 : i32, i32
  }
}

</mosaic_0001>

<llo_original>
// kernel: tpu_custom_call.1
$region0: #{tpu_custom_call.1}
  #allocation0 [shape = 'u32[]', space=smem, size = 0x4, offset = 0x4, fixed_abs, tag = 'smem constant byte address 0x4 - core index']
  #allocation1 [shape = 'u32[72,128]{1,0:T(1,128)}', space=vmem, size = 0x9000, scoped, tag = 'internal scratch']
  #allocation2 [shape = 'bf16[256,128]{1,0:T(8,128)(2,1)}', space=vmem, size = 0x10000, scoped, tag = 'scratch operand']
  #allocation3 [shape = 'bf16[256,128]{1,0:T(8,128)(2,1)}', space=vmem, size = 0x10000, scoped, tag = 'scratch operand']
  %s0 = inlined_call_operand.hbm [shape: bf16[256,128], index: 0, kind: input, shape index: {}]
  %s1 = inlined_call_operand.hbm [shape: bf16[256,256], index: 1, kind: input, shape index: {}]
  %s2 = inlined_call_operand.hbm [shape: bf16[3,256,128], index: 2, kind: input, shape index: {}]
  %s3 = inlined_call_operand.hbm [shape: f32[3,1,128], index: 3, kind: input, shape index: {}]
  %s4 = inlined_call_operand.hbm [shape: f32[256,128], index: 4, kind: output, shape index: {}]
  %s5 = sld [smem:[#allocation0]]
  $region77: #{tpu_custom_call.1} parent=0
    _
  %s7 = ssub.s32 1, %s5
  %s8 = scalar_select 0, %s7, %s5
  $region1: #{tpu_custom_call.1} parent=0
    #allocation4 [shape = 'u8[65536]{0}', space=vmem, size = 0x10000, scoped, tag = 'input window, operand 0, single buffered']
    #allocation5 [shape = 's32[2]{0}', space=sflag, size = 0x8, scoped, tag = 'scoped memory for tpu_custom_call.1']
    #allocation6 [shape = 's32[2]{0}', space=sflag, size = 0x8, scoped, tag = 'scoped memory for tpu_custom_call.1']
    #allocation7 [shape = 'u8[131072]{0}', space=vmem, size = 0x20000, scoped, tag = 'input window, operand 1']
    #allocation8 [shape = 's32[2]{0}', space=sflag, size = 0x8, scoped, tag = 'scoped memory for tpu_custom_call.1']
    #allocation9 [shape = 'u8[131072]{0}', space=vmem, size = 0x20000, scoped, tag = 'input window, operand 2']
    #allocation10 [shape = 'u8[1024]{0}', space=vmem, size = 0x400, scoped, tag = 'input window, operand 3']
    #allocation11 [shape = 's32[2]{0}', space=sflag, size = 0x8, scoped, tag = 'scoped memory for tpu_custom_call.1']
    #allocation12 [shape = 'u8[131072]{0}', space=vmem, size = 0x20000, scoped, tag = 'output window, operand 0, single buffered']
    %9 = vsyncpa [#allocation5], 0
    %10 = vsyncpa [#allocation8], 0
    %s11 = scalar_lea.sflag [#allocation8], 1
    %12 = vsyncpa %s11, 0
    %13 = vsyncpa [#allocation11], 0
    %s14 = scalar_lea.sflag [#allocation11], 1
    %15 = vsyncpa %s14, 0
    %16 = vsyncpa [#allocation6], 0
    loop: start=0, step=1, limit=8
    $region2: #{tpu_custom_call.1} parent=1 // loop_pre_header
      _
    $region3: #{tpu_custom_call.1} parent=1 // loop_header
      %s18 = sphi 0, %s22
      %p19 = scmp.ge.s32.totalorder %s18, 8
      %s25 = sphi 0, %s37
      %s26 = sphi 0, %s33
      %s27 = sphi 0, %s25
      %s28 = sphi 0, %s26
      %s29 = sphi 0, %s27
      %s30 = sphi 0, %s28
      %s38 = sphi 0, %s38
      %s40 = sphi 0, %s38
      %s41 = sphi 0, %s40
      %s55 = sphi 0, %s41
      %s61 = sphi 0, %s63
      %s64 = sphi 0, %s61
      %s65 = sphi 0, %s64
      %s81 = sphi 0, %s65
      %s87 = sphi 0, %s89
      %s90 = sphi 0, %s87
      %s91 = sphi 0, %s90
      %s107 = sphi 0, %s91
      %s113 = sphi 0, %s115
      %s116 = sphi 0, %s113
      %s117 = sphi 0, %s116
      %s133 = sphi 0, %s117
      %s137 = sphi 0, %s137
      %s139 = sphi 0, %s137
      %s140 = sphi 0, %s139
      %s154 = sphi 0, %s140
    $region4: #{tpu_custom_call.1} parent=1 // loop_header_branch
      %21 = sbr.rel (%p19) target = $region8
    $region5: #{tpu_custom_call.1} parent=1 // loop_body
      %s23 = ssub.s32 %s18, 1
      %s24 = ssub.s32 %s18, 2
      %s31 = sadd.s32 1, %s26
      %p32 = scmp.ge.s32.totalorder %s31, 2
      %s33 = scalar_select %p32, 0, %s31
      %s34 = sadd.s32 1, %s25
      %s35 = scalar_select %p32, %s34, %s25
      %p36 = scmp.ge.s32.totalorder %s35, 3
      %s37 = scalar_select %p36, 0, %s35
      %s39 = sadd.s32 %s38, 1
      %p42 = scmp.eq.s32.totalorder %s18, 5
      %p43 = scmp.ne.s32.totalorder %s38, %s40
      %p44 = scmp.eq.s32.totalorder %s18, 0
      %p45 = por %p43, %p44
      %p46 = scmp.ne.s32.totalorder %s38, %s40
      %p47 = scmp.eq.s32.totalorder %s23, 5
      %p48 = por %p46, %p47
      %p49 = scmp.ne.s32.totalorder %s40, %s41
      %p50 = scmp.eq.s32.totalorder %s23, 0
      %p51 = por %p49, %p50
      %p52 = scmp.ne.s32.totalorder %s40, %s41
      %p53 = scmp.eq.s32.totalorder %s24, 5
      %p54 = por %p52, %p53
      %p56 = scmp.ne.s32.totalorder %s41, %s55
      %p57 = scmp.eq.s32.totalorder %s24, 0
      %p58 = por %p56, %p57
      %s59 = ssub.s32 %s26, %s33
      %p60 = scmp.eq.s32.totalorder %s59, 0
      %s62 = sadd.s32 %s61, 1
      %s63 = scalar_select %p60, %s61, %s62
      %p66 = pneg %p60
      %p67 = scmp.eq.s32.totalorder %s18, 5
      %p68 = por %p66, %p67
      %p69 = scmp.ne.s32.totalorder %s61, %s64
      %p70 = scmp.eq.s32.totalorder %s18, 0
      %p71 = por %p69, %p70
      %p72 = scmp.ne.s32.totalorder %s61, %s64
      %p73 = scmp.eq.s32.totalorder %s23, 5
      %p74 = por %p72, %p73
      %p75 = scmp.ne.s32.totalorder %s64, %s65
      %p76 = scmp.eq.s32.totalorder %s23, 0
      %p77 = por %p75, %p76
      %p78 = scmp.ne.s32.totalorder %s64, %s65
      %p79 = scmp.eq.s32.totalorder %s24, 5
      %p80 = por %p78, %p79
      %p82 = scmp.ne.s32.totalorder %s65, %s81
      %p83 = scmp.eq.s32.totalorder %s24, 0
      %p84 = por %p82, %p83
      %s85 = ssub.s32 %s25, %s37
      %p86 = scmp.eq.s32.totalorder %s85, 0
      %s88 = sadd.s32 %s87, 1
      %s89 = scalar_select %p86, %s87, %s88
      %p92 = pneg %p86
      %p93 = scmp.eq.s32.totalorder %s18, 5
      %p94 = por %p92, %p93
      %p95 = scmp.ne.s32.totalorder %s87, %s90
      %p96 = scmp.eq.s32.totalorder %s18, 0
      %p97 = por %p95, %p96
      %p98 = scmp.ne.s32.totalorder %s87, %s90
      %p99 = scmp.eq.s32.totalorder %s23, 5
      %p100 = por %p98, %p99
      %p101 = scmp.ne.s32.totalorder %s90, %s91
      %p102 = scmp.eq.s32.totalorder %s23, 0
      %p103 = por %p101, %p102
      %p104 = scmp.ne.s32.totalorder %s90, %s91
      %p105 = scmp.eq.s32.totalorder %s24, 5
      %p106 = por %p104, %p105
      %p108 = scmp.ne.s32.totalorder %s91, %s107
      %p109 = scmp.eq.s32.totalorder %s24, 0
      %p110 = por %p108, %p109
      %s111 = ssub.s32 %s25, %s37
      %p112 = scmp.eq.s32.totalorder %s111, 0
      %s114 = sadd.s32 %s113, 1
      %s115 = scalar_select %p112, %s113, %s114
      %p118 = pneg %p112
      %p119 = scmp.eq.s32.totalorder %s18, 5
      %p120 = por %p118, %p119
      %p121 = scmp.ne.s32.totalorder %s113, %s116
      %p122 = scmp.eq.s32.totalorder %s18, 0
      %p123 = por %p121, %p122
      %p124 = scmp.ne.s32.totalorder %s113, %s116
      %p125 = scmp.eq.s32.totalorder %s23, 5
      %p126 = por %p124, %p125
      %p127 = scmp.ne.s32.totalorder %s116, %s117
      %p128 = scmp.eq.s32.totalorder %s23, 0
      %p129 = por %p127, %p128
      %p130 = scmp.ne.s32.totalorder %s116, %s117
      %p131 = scmp.eq.s32.totalorder %s24, 5
      %p132 = por %p130, %p131
      %p134 = scmp.ne.s32.totalorder %s117, %s133
      %p135 = scmp.eq.s32.totalorder %s24, 0
      %p136 = por %p134, %p135
      %s138 = sadd.s32 %s137, 1
      %p141 = scmp.eq.s32.totalorder %s18, 5
      %p142 = scmp.ne.s32.totalorder %s137, %s139
      %p143 = scmp.eq.s32.totalorder %s18, 0
      %p144 = por %p142, %p143
      %p145 = scmp.ne.s32.totalorder %s137, %s139
      %p146 = scmp.eq.s32.totalorder %s23, 5
      %p147 = por %p145, %p146
      %p148 = scmp.ne.s32.totalorder %s139, %s140
      %p149 = scmp.eq.s32.totalorder %s23, 0
      %p150 = por %p148, %p149
      %p151 = scmp.ne.s32.totalorder %s139, %s140
      %p152 = scmp.eq.s32.totalorder %s24, 5
      %p153 = por %p151, %p152
      %p155 = scmp.ne.s32.totalorder %s140, %s154
      %p156 = scmp.eq.s32.totalorder %s24, 0
      %p157 = por %p155, %p156
      %p158 = scmp.le.s32.totalorder 1, %s18
      %p159 = scmp.lt.s32.totalorder %s18, 7
      %p160 = pnand %p158, %p159
      %p161 = pneg %p160
      // Predicated region
      $region9: #{tpu_custom_call.1} parent=5 // pred_check
        _
      $region10: #{tpu_custom_call.1} parent=5 // pred_check_branch
        %163 = sbr.rel (%p160) target = $region12
      $region11: #{tpu_custom_call.1} parent=5 // pred_region
        %s164 = ssub.s32 %s18, 1
        // Predicated region
        $region13: #{tpu_custom_call.1} parent=11 // pred_check
          %p165 = pneg %p51
        $region14: #{tpu_custom_call.1} parent=11 // pred_check_branch
          %167 = sbr.rel (%p165) target = $region16
        $region15: #{tpu_custom_call.1} parent=11 // pred_region
          %169 = vsyncadd [#allocation5], 0
          %s170 = sshll.u32 %s0, 4
          %s171 = int_to_ptr.hbm [resolvable:$true] %s170
          %s172 = sshll.u32 [#allocation4], 4
          %s173 = int_to_ptr.vmem [resolvable:$true] %s172
          %178 = dma.hbm_to_vmem [thread:$0]  %s171, 2048, %s173, [#allocation5], 64, 64, 4
        $region16: #{tpu_custom_call.1} parent=11 // pred_fallthru
          _
      $region12: #{tpu_custom_call.1} parent=5 // pred_fallthru
        _
      %p179 = scmp.lt.s32.totalorder %s18, 6
      // Predicated region
      $region17: #{tpu_custom_call.1} parent=5 // pred_check
        %p180 = pneg %p179
      $region18: #{tpu_custom_call.1} parent=5 // pred_check_branch
        %182 = sbr.rel (%p180) target = $region20
      $region19: #{tpu_custom_call.1} parent=5 // pred_region
        // Predicated region
        $region21: #{tpu_custom_call.1} parent=19 // pred_check
          %p183 = pneg %p71
        $region22: #{tpu_custom_call.1} parent=19 // pred_check_branch
          %185 = sbr.rel (%p183) target = $region24
        $region23: #{tpu_custom_call.1} parent=19 // pred_region
          %s186 = sand.u32 %s18, 1
          %s187 = scalar_lea.sflag [#allocation8], %s186
          %s188 = sand.u32 %s61, 1
          %s189 = smul.addr %s188, 128
          %s190 = scalar_lea.vmem [#allocation7], %s189
          %s191 = smul.u32 16, %s26
          %193 = vsyncadd %s187, 0
          %s194 = smul.addr %s191, 2
          %s195 = smul.addr %s194, 4
          %s196 = scalar_lea.hbm %s1, %s195
          %s197 = sshll.u32 %s196, 4
          %s198 = int_to_ptr.hbm [resolvable:$true] %s197
          %s199 = sshll.u32 %s190, 4
          %s200 = int_to_ptr.vmem [resolvable:$true] %s199
          %205 = dma.hbm_to_vmem [thread:$0]  %s198, 2048, %s200, %s187, 128, 128, 8
        $region24: #{tpu_custom_call.1} parent=19 // pred_fallthru
          _
        // Predicated region
        $region25: #{tpu_custom_call.1} parent=19 // pred_check
          %p206 = pneg %p97
        $region26: #{tpu_custom_call.1} parent=19 // pred_check_branch
          %208 = sbr.rel (%p206) target = $region28
        $region27: #{tpu_custom_call.1} parent=19 // pred_region
          %s209 = sand.u32 %s18, 1
          %s210 = scalar_lea.sflag [#allocation8], %s209
          %s211 = sand.u32 %s87, 1
          %s212 = smul.addr %s211, 128
          %s213 = scalar_lea.vmem [#allocation9], %s212
          %215 = vsyncadd %s210, 0
          %s216 = smul.addr %s25, 32
          %s217 = smul.addr %s216, 4
          %s218 = scalar_lea.hbm %s2, %s217
          %s219 = sshll.u32 %s218, 4
          %s220 = int_to_ptr.hbm [resolvable:$true] %s219
          %s221 = sshll.u32 %s213, 4
          %s222 = int_to_ptr.vmem [resolvable:$true] %s221
          %227 = dma.hbm_to_vmem [thread:$0]  %s220, 2048, %s222, %s210, 64, 64, 4
        $region28: #{tpu_custom_call.1} parent=19 // pred_fallthru
          _
        // Predicated region
        $region29: #{tpu_custom_call.1} parent=19 // pred_check
          %p228 = pneg %p123
        $region30: #{tpu_custom_call.1} parent=19 // pred_check_branch
          %230 = sbr.rel (%p228) target = $region32
        $region31: #{tpu_custom_call.1} parent=19 // pred_region
          %s231 = sand.u32 %s113, 1
          %s232 = scalar_lea.sflag [#allocation11], %s231
          %s233 = sand.u32 %s113, 1
          %s234 = scalar_lea.vmem [#allocation10], %s233
          %236 = vsyncadd %s232, 0
          %s237 = scalar_lea.hbm %s3, %s25
          %s239 = sshll.u32 %s237, 4
          %s240 = int_to_ptr.hbm [resolvable:$true] %s239
          %s241 = sshll.u32 %s234, 4
          %s242 = int_to_ptr.vmem [resolvable:$true] %s241
          %244 = dma.hbm_to_vmem [thread:$0]  %s240, 16, %s242, %s232
        $region32: #{tpu_custom_call.1} parent=19 // pred_fallthru
          _
      $region20: #{tpu_custom_call.1} parent=5 // pred_fallthru
        _
      %p245 = scmp.le.s32.totalorder 1, %s18
      %p246 = scmp.lt.s32.totalorder %s18, 7
      %p247 = pnand %p245, %p246
      %p248 = pneg %p247
      // Predicated region
      $region33: #{tpu_custom_call.1} parent=5 // pred_check
        _
      $region34: #{tpu_custom_call.1} parent=5 // pred_check_branch
        %250 = sbr.rel (%p247) target = $region36
      $region35: #{tpu_custom_call.1} parent=5 // pred_region
        %s251 = ssub.s32 %s18, 1
        // Predicated region
        $region37: #{tpu_custom_call.1} parent=35 // pred_check
          %p252 = pneg %p51
        $region38: #{tpu_custom_call.1} parent=35 // pred_check_branch
          %254 = sbr.rel (%p252) target = $region40
        $region39: #{tpu_custom_call.1} parent=35 // pred_region
          %256 = dma.done [#allocation5], 2048
        $region40: #{tpu_custom_call.1} parent=35 // pred_fallthru
          _
        %s257 = sand.u32 %s23, 1
        %s258 = scalar_lea.sflag [#allocation8], %s257
        %s259 = sand.u32 %s64, 1
        %s260 = smul.addr %s259, 128
        %s261 = scalar_lea.vmem [#allocation7], %s260
        // Predicated region
        $region41: #{tpu_custom_call.1} parent=35 // pred_check
          %p262 = pneg %p77
        $region42: #{tpu_custom_call.1} parent=35 // pred_check_branch
          %264 = sbr.rel (%p262) target = $region44
        $region43: #{tpu_custom_call.1} parent=35 // pred_region
          %266 = dma.done %s258, 2048
        $region44: #{tpu_custom_call.1} parent=35 // pred_fallthru
          _
        %s267 = sand.u32 %s23, 1
        %s268 = scalar_lea.sflag [#allocation8], %s267
        %s269 = sand.u32 %s90, 1
        %s270 = smul.addr %s269, 128
        %s271 = scalar_lea.vmem [#allocation9], %s270
        // Predicated region
        $region45: #{tpu_custom_call.1} parent=35 // pred_check
          %p272 = pneg %p103
        $region46: #{tpu_custom_call.1} parent=35 // pred_check_branch
          %274 = sbr.rel (%p272) target = $region48
        $region47: #{tpu_custom_call.1} parent=35 // pred_region
          %276 = dma.done %s268, 2048
        $region48: #{tpu_custom_call.1} parent=35 // pred_fallthru
          _
        %s277 = sand.u32 %s116, 1
        %s278 = scalar_lea.sflag [#allocation11], %s277
        %s279 = sand.u32 %s116, 1
        %s280 = scalar_lea.vmem [#allocation10], %s279
        // Predicated region
        $region49: #{tpu_custom_call.1} parent=35 // pred_check
          %p281 = pneg %p129
        $region50: #{tpu_custom_call.1} parent=35 // pred_check_branch
          %283 = sbr.rel (%p281) target = $region52
        $region51: #{tpu_custom_call.1} parent=35 // pred_region
          %285 = dma.done %s278, 16
        $region52: #{tpu_custom_call.1} parent=35 // pred_fallthru
          _
        %p286 = pneg %p51
        %p287 = pneg %p48
        %s288 = sand.u32 %s23, 1
        %s289 = scalar_lea.sflag [#allocation8], %s288
        %s290 = sand.u32 %s64, 1
        %s291 = smul.addr %s290, 128
        %s292 = scalar_lea.vmem [#allocation7], %s291
        %p293 = pneg %p77
        %p294 = pneg %p74
        %s295 = sand.u32 %s23, 1
        %s296 = scalar_lea.sflag [#allocation8], %s295
        %s297 = sand.u32 %s90, 1
        %s298 = smul.addr %s297, 128
        %s299 = scalar_lea.vmem [#allocation9], %s298
        %p300 = pneg %p103
        %p301 = pneg %p100
        %s302 = sand.u32 %s116, 1
        %s303 = scalar_lea.sflag [#allocation11], %s302
        %s304 = sand.u32 %s116, 1
        %s305 = scalar_lea.vmem [#allocation10], %s304
        %p306 = pneg %p129
        %p307 = pneg %p126
        %p308 = pneg %p150
        %p309 = pneg %p147
        %s310 = smul.u32 16, %s28
        %s311 = smul.u32 %s28, 128
        %v312 = vld [vmem:[%s261] sm:$0xff]
        %v313 = vld [vmem:[%s261 + $0x8] sm:$0xff]
        %v314 = vld [vmem:[%s261 + $0x10] sm:$0xff]
        %v315 = vld [vmem:[%s261 + $0x18] sm:$0xff]
        %v316 = vld [vmem:[%s261 + $0x20] sm:$0xff]
        %v317 = vld [vmem:[%s261 + $0x28] sm:$0xff]
        %v318 = vld [vmem:[%s261 + $0x30] sm:$0xff]
        %v319 = vld [vmem:[%s261 + $0x38] sm:$0xff]
        %v320 = vld [vmem:[%s261 + $0x40] sm:$0xff]
        %v321 = vld [vmem:[%s261 + $0x48] sm:$0xff]
        %v322 = vld [vmem:[%s261 + $0x50] sm:$0xff]
        %v323 = vld [vmem:[%s261 + $0x58] sm:$0xff]
        %v324 = vld [vmem:[%s261 + $0x60] sm:$0xff]
        %v325 = vld [vmem:[%s261 + $0x68] sm:$0xff]
        %v326 = vld [vmem:[%s261 + $0x70] sm:$0xff]
        %v327 = vld [vmem:[%s261 + $0x78] sm:$0xff]
        %v328 = vunpack.c.l.bf16 %v312
        %v329 = vunpack.c.h.bf16 %v312
        %v330 = vunpack.c.l.bf16 %v313
        %v331 = vunpack.c.h.bf16 %v313
        %v332 = vunpack.c.l.bf16 %v314
        %v333 = vunpack.c.h.bf16 %v314
        %v334 = vunpack.c.l.bf16 %v315
        %v335 = vunpack.c.h.bf16 %v315
        %v336 = vunpack.c.l.bf16 %v316
        %v337 = vunpack.c.h.bf16 %v316
        %v338 = vunpack.c.l.bf16 %v317
        %v339 = vunpack.c.h.bf16 %v317
        %v340 = vunpack.c.l.bf16 %v318
        %v341 = vunpack.c.h.bf16 %v318
        %v342 = vunpack.c.l.bf16 %v319
        %v343 = vunpack.c.h.bf16 %v319
        %v344 = vunpack.c.l.bf16 %v320
        %v345 = vunpack.c.h.bf16 %v320
        %v346 = vunpack.c.l.bf16 %v321
        %v347 = vunpack.c.h.bf16 %v321
        %v348 = vunpack.c.l.bf16 %v322
        %v349 = vunpack.c.h.bf16 %v322
        %v350 = vunpack.c.l.bf16 %v323
        %v351 = vunpack.c.h.bf16 %v323
        %v352 = vunpack.c.l.bf16 %v324
        %v353 = vunpack.c.h.bf16 %v324
        %v354 = vunpack.c.l.bf16 %v325
        %v355 = vunpack.c.h.bf16 %v325
        %v356 = vunpack.c.l.bf16 %v326
        %v357 = vunpack.c.h.bf16 %v326
        %v358 = vunpack.c.l.bf16 %v327
        %v359 = vunpack.c.h.bf16 %v327
        %v360 = vadd.f32 %v328, %v329
        %361 = vadd.xlane.f32.xlu0 %v360
        %v362 = vpop.xlane.xlu0 %361
        %v363 = vadd.f32 %v330, %v331
        %364 = vadd.xlane.f32.xlu0 %v363
        %v365 = vpop.xlane.xlu0 %364
        %v366 = vadd.f32 %v332, %v333
        %367 = vadd.xlane.f32.xlu0 %v366
        %v368 = vpop.xlane.xlu0 %367
        %v369 = vadd.f32 %v334, %v335
        %370 = vadd.xlane.f32.xlu0 %v369
        %v371 = vpop.xlane.xlu0 %370
        %v372 = vadd.f32 %v336, %v337
        %373 = vadd.xlane.f32.xlu0 %v372
        %v374 = vpop.xlane.xlu0 %373
        %v375 = vadd.f32 %v338, %v339
        %376 = vadd.xlane.f32.xlu0 %v375
        %v377 = vpop.xlane.xlu0 %376
        %v378 = vadd.f32 %v340, %v341
        %379 = vadd.xlane.f32.xlu0 %v378
        %v380 = vpop.xlane.xlu0 %379
        %v381 = vadd.f32 %v342, %v343
        %382 = vadd.xlane.f32.xlu0 %v381
        %v383 = vpop.xlane.xlu0 %382
        %v384 = vadd.f32 %v344, %v345
        %385 = vadd.xlane.f32.xlu0 %v384
        %v386 = vpop.xlane.xlu0 %385
        %v387 = vadd.f32 %v346, %v347
        %388 = vadd.xlane.f32.xlu0 %v387
        %v389 = vpop.xlane.xlu0 %388
        %v390 = vadd.f32 %v348, %v349
        %391 = vadd.xlane.f32.xlu0 %v390
        %v392 = vpop.xlane.xlu0 %391
        %v393 = vadd.f32 %v350, %v351
        %394 = vadd.xlane.f32.xlu0 %v393
        %v395 = vpop.xlane.xlu0 %394
        %v396 = vadd.f32 %v352, %v353
        %397 = vadd.xlane.f32.xlu0 %v396
        %v398 = vpop.xlane.xlu0 %397
        %v399 = vadd.f32 %v354, %v355
        %400 = vadd.xlane.f32.xlu0 %v399
        %v401 = vpop.xlane.xlu0 %400
        %v402 = vadd.f32 %v356, %v357
        %403 = vadd.xlane.f32.xlu0 %v402
        %v404 = vpop.xlane.xlu0 %403
        %v405 = vadd.f32 %v358, %v359
        %406 = vadd.xlane.f32.xlu0 %v405
        %v407 = vpop.xlane.xlu0 %406
        %v408 = vmax.f32 %v362, 1.0
        %v409 = vmax.f32 %v365, 1.0
        %v410 = vmax.f32 %v368, 1.0
        %v411 = vmax.f32 %v371, 1.0
        %v412 = vmax.f32 %v374, 1.0
        %v413 = vmax.f32 %v377, 1.0
        %v414 = vmax.f32 %v380, 1.0
        %v415 = vmax.f32 %v383, 1.0
        %v416 = vmax.f32 %v386, 1.0
        %v417 = vmax.f32 %v389, 1.0
        %v418 = vmax.f32 %v392, 1.0
        %v419 = vmax.f32 %v395, 1.0
        %v420 = vmax.f32 %v398, 1.0
        %v421 = vmax.f32 %v401, 1.0
        %v422 = vmax.f32 %v404, 1.0
        %v423 = vmax.f32 %v407, 1.0
        %v424 = vrcp.pop %v408
        %v425 = vmul.f32 %v408, %v424
        %v426 = vsub.f32 1.0, %v425
        %v427 = vmul.f32 %v424, %v426
        %v428 = vadd.f32 %v424, %v427
        %vm429 = vweird.f32 %v408
        %vm430 = vweird.f32 %v424
        %vm431 = vmor %vm429, %vm430
        %v432 = vsel %vm431, %v424, %v428
        %v433 = vand.u32 2147483647, %v408
        %vm434 = vcmp.eq.f32.partialorder %v433, 8.507059e+37
        %v435 = vand.u32 %v408, 2147483648
        %v436 = vor.u32 1.1754944e-38, %v435
        %v437 = vsel %vm434, %v436, %v432
        %v438 = vmul.f32 1.0, %v437
        %v439 = vrcp.pop %v409
        %v440 = vmul.f32 %v409, %v439
        %v441 = vsub.f32 1.0, %v440
        %v442 = vmul.f32 %v439, %v441
        %v443 = vadd.f32 %v439, %v442
        %vm444 = vweird.f32 %v409
        %vm445 = vweird.f32 %v439
        %vm446 = vmor %vm444, %vm445
        %v447 = vsel %vm446, %v439, %v443
        %v448 = vand.u32 2147483647, %v409
        %vm449 = vcmp.eq.f32.partialorder %v448, 8.507059e+37
        %v450 = vand.u32 %v409, 2147483648
        %v451 = vor.u32 1.1754944e-38, %v450
        %v452 = vsel %vm449, %v451, %v447
        %v453 = vmul.f32 1.0, %v452
        %v454 = vrcp.pop %v410
        %v455 = vmul.f32 %v410, %v454
        %v456 = vsub.f32 1.0, %v455
        %v457 = vmul.f32 %v454, %v456
        %v458 = vadd.f32 %v454, %v457
        %vm459 = vweird.f32 %v410
        %vm460 = vweird.f32 %v454
        %vm461 = vmor %vm459, %vm460
        %v462 = vsel %vm461, %v454, %v458
        %v463 = vand.u32 2147483647, %v410
        %vm464 = vcmp.eq.f32.partialorder %v463, 8.507059e+37
        %v465 = vand.u32 %v410, 2147483648
        %v466 = vor.u32 1.1754944e-38, %v465
        %v467 = vsel %vm464, %v466, %v462
        %v468 = vmul.f32 1.0, %v467
        %v469 = vrcp.pop %v411
        %v470 = vmul.f32 %v411, %v469
        %v471 = vsub.f32 1.0, %v470
        %v472 = vmul.f32 %v469, %v471
        %v473 = vadd.f32 %v469, %v472
        %vm474 = vweird.f32 %v411
        %vm475 = vweird.f32 %v469
        %vm476 = vmor %vm474, %vm475
        %v477 = vsel %vm476, %v469, %v473
        %v478 = vand.u32 2147483647, %v411
        %vm479 = vcmp.eq.f32.partialorder %v478, 8.507059e+37
        %v480 = vand.u32 %v411, 2147483648
        %v481 = vor.u32 1.1754944e-38, %v480
        %v482 = vsel %vm479, %v481, %v477
        %v483 = vmul.f32 1.0, %v482
        %v484 = vrcp.pop %v412
        %v485 = vmul.f32 %v412, %v484
        %v486 = vsub.f32 1.0, %v485
        %v487 = vmul.f32 %v484, %v486
        %v488 = vadd.f32 %v484, %v487
        %vm489 = vweird.f32 %v412
        %vm490 = vweird.f32 %v484
        %vm491 = vmor %vm489, %vm490
        %v492 = vsel %vm491, %v484, %v488
        %v493 = vand.u32 2147483647, %v412
        %vm494 = vcmp.eq.f32.partialorder %v493, 8.507059e+37
        %v495 = vand.u32 %v412, 2147483648
        %v496 = vor.u32 1.1754944e-38, %v495
        %v497 = vsel %vm494, %v496, %v492
        %v498 = vmul.f32 1.0, %v497
        %v499 = vrcp.pop %v413
        %v500 = vmul.f32 %v413, %v499
        %v501 = vsub.f32 1.0, %v500
        %v502 = vmul.f32 %v499, %v501
        %v503 = vadd.f32 %v499, %v502
        %vm504 = vweird.f32 %v413
        %vm505 = vweird.f32 %v499
        %vm506 = vmor %vm504, %vm505
        %v507 = vsel %vm506, %v499, %v503
        %v508 = vand.u32 2147483647, %v413
        %vm509 = vcmp.eq.f32.partialorder %v508, 8.507059e+37
        %v510 = vand.u32 %v413, 2147483648
        %v511 = vor.u32 1.1754944e-38, %v510
        %v512 = vsel %vm509, %v511, %v507
        %v513 = vmul.f32 1.0, %v512
        %v514 = vrcp.pop %v414
        %v515 = vmul.f32 %v414, %v514
        %v516 = vsub.f32 1.0, %v515
        %v517 = vmul.f32 %v514, %v516
        %v518 = vadd.f32 %v514, %v517
        %vm519 = vweird.f32 %v414
        %vm520 = vweird.f32 %v514
        %vm521 = vmor %vm519, %vm520
        %v522 = vsel %vm521, %v514, %v518
        %v523 = vand.u32 2147483647, %v414
        %vm524 = vcmp.eq.f32.partialorder %v523, 8.507059e+37
        %v525 = vand.u32 %v414, 2147483648
        %v526 = vor.u32 1.1754944e-38, %v525
        %v527 = vsel %vm524, %v526, %v522
        %v528 = vmul.f32 1.0, %v527
        %v529 = vrcp.pop %v415
        %v530 = vmul.f32 %v415, %v529
        %v531 = vsub.f32 1.0, %v530
        %v532 = vmul.f32 %v529, %v531
        %v533 = vadd.f32 %v529, %v532
        %vm534 = vweird.f32 %v415
        %vm535 = vweird.f32 %v529
        %vm536 = vmor %vm534, %vm535
        %v537 = vsel %vm536, %v529, %v533
        %v538 = vand.u32 2147483647, %v415
        %vm539 = vcmp.eq.f32.partialorder %v538, 8.507059e+37
        %v540 = vand.u32 %v415, 2147483648
        %v541 = vor.u32 1.1754944e-38, %v540
        %v542 = vsel %vm539, %v541, %v537
        %v543 = vmul.f32 1.0, %v542
        %v544 = vrcp.pop %v416
        %v545 = vmul.f32 %v416, %v544
        %v546 = vsub.f32 1.0, %v545
        %v547 = vmul.f32 %v544, %v546
        %v548 = vadd.f32 %v544, %v547
        %vm549 = vweird.f32 %v416
        %vm550 = vweird.f32 %v544
        %vm551 = vmor %vm549, %vm550
        %v552 = vsel %vm551, %v544, %v548
        %v553 = vand.u32 2147483647, %v416
        %vm554 = vcmp.eq.f32.partialorder %v553, 8.507059e+37
        %v555 = vand.u32 %v416, 2147483648
        %v556 = vor.u32 1.1754944e-38, %v555
        %v557 = vsel %vm554, %v556, %v552
        %v558 = vmul.f32 1.0, %v557
        %v559 = vrcp.pop %v417
        %v560 = vmul.f32 %v417, %v559
        %v561 = vsub.f32 1.0, %v560
        %v562 = vmul.f32 %v559, %v561
        %v563 = vadd.f32 %v559, %v562
        %vm564 = vweird.f32 %v417
        %vm565 = vweird.f32 %v559
        %vm566 = vmor %vm564, %vm565
        %v567 = vsel %vm566, %v559, %v563
        %v568 = vand.u32 2147483647, %v417
        %vm569 = vcmp.eq.f32.partialorder %v568, 8.507059e+37
        %v570 = vand.u32 %v417, 2147483648
        %v571 = vor.u32 1.1754944e-38, %v570
        %v572 = vsel %vm569, %v571, %v567
        %v573 = vmul.f32 1.0, %v572
        %v574 = vrcp.pop %v418
        %v575 = vmul.f32 %v418, %v574
        %v576 = vsub.f32 1.0, %v575
        %v577 = vmul.f32 %v574, %v576
        %v578 = vadd.f32 %v574, %v577
        %vm579 = vweird.f32 %v418
        %vm580 = vweird.f32 %v574
        %vm581 = vmor %vm579, %vm580
        %v582 = vsel %vm581, %v574, %v578
        %v583 = vand.u32 2147483647, %v418
        %vm584 = vcmp.eq.f32.partialorder %v583, 8.507059e+37
        %v585 = vand.u32 %v418, 2147483648
        %v586 = vor.u32 1.1754944e-38, %v585
        %v587 = vsel %vm584, %v586, %v582
        %v588 = vmul.f32 1.0, %v587
        %v589 = vrcp.pop %v419
        %v590 = vmul.f32 %v419, %v589
        %v591 = vsub.f32 1.0, %v590
        %v592 = vmul.f32 %v589, %v591
        %v593 = vadd.f32 %v589, %v592
        %vm594 = vweird.f32 %v419
        %vm595 = vweird.f32 %v589
        %vm596 = vmor %vm594, %vm595
        %v597 = vsel %vm596, %v589, %v593
        %v598 = vand.u32 2147483647, %v419
        %vm599 = vcmp.eq.f32.partialorder %v598, 8.507059e+37
        %v600 = vand.u32 %v419, 2147483648
        %v601 = vor.u32 1.1754944e-38, %v600
        %v602 = vsel %vm599, %v601, %v597
        %v603 = vmul.f32 1.0, %v602
        %v604 = vrcp.pop %v420
        %v605 = vmul.f32 %v420, %v604
        %v606 = vsub.f32 1.0, %v605
        %v607 = vmul.f32 %v604, %v606
        %v608 = vadd.f32 %v604, %v607
        %vm609 = vweird.f32 %v420
        %vm610 = vweird.f32 %v604
        %vm611 = vmor %vm609, %vm610
        %v612 = vsel %vm611, %v604, %v608
        %v613 = vand.u32 2147483647, %v420
        %vm614 = vcmp.eq.f32.partialorder %v613, 8.507059e+37
        %v615 = vand.u32 %v420, 2147483648
        %v616 = vor.u32 1.1754944e-38, %v615
        %v617 = vsel %vm614, %v616, %v612
        %v618 = vmul.f32 1.0, %v617
        %v619 = vrcp.pop %v421
        %v620 = vmul.f32 %v421, %v619
        %v621 = vsub.f32 1.0, %v620
        %v622 = vmul.f32 %v619, %v621
        %v623 = vadd.f32 %v619, %v622
        %vm624 = vweird.f32 %v421
        %vm625 = vweird.f32 %v619
        %vm626 = vmor %vm624, %vm625
        %v627 = vsel %vm626, %v619, %v623
        %v628 = vand.u32 2147483647, %v421
        %vm629 = vcmp.eq.f32.partialorder %v628, 8.507059e+37
        %v630 = vand.u32 %v421, 2147483648
        %v631 = vor.u32 1.1754944e-38, %v630
        %v632 = vsel %vm629, %v631, %v627
        %v633 = vmul.f32 1.0, %v632
        %v634 = vrcp.pop %v422
        %v635 = vmul.f32 %v422, %v634
        %v636 = vsub.f32 1.0, %v635
        %v637 = vmul.f32 %v634, %v636
        %v638 = vadd.f32 %v634, %v637
        %vm639 = vweird.f32 %v422
        %vm640 = vweird.f32 %v634
        %vm641 = vmor %vm639, %vm640
        %v642 = vsel %vm641, %v634, %v638
        %v643 = vand.u32 2147483647, %v422
        %vm644 = vcmp.eq.f32.partialorder %v643, 8.507059e+37
        %v645 = vand.u32 %v422, 2147483648
        %v646 = vor.u32 1.1754944e-38, %v645
        %v647 = vsel %vm644, %v646, %v642
        %v648 = vmul.f32 1.0, %v647
        %v649 = vrcp.pop %v423
        %v650 = vmul.f32 %v423, %v649
        %v651 = vsub.f32 1.0, %v650
        %v652 = vmul.f32 %v649, %v651
        %v653 = vadd.f32 %v649, %v652
        %vm654 = vweird.f32 %v423
        %vm655 = vweird.f32 %v649
        %vm656 = vmor %vm654, %vm655
        %v657 = vsel %vm656, %v649, %v653
        %v658 = vand.u32 2147483647, %v423
        %vm659 = vcmp.eq.f32.partialorder %v658, 8.507059e+37
        %v660 = vand.u32 %v423, 2147483648
        %v661 = vor.u32 1.1754944e-38, %v660
        %v662 = vsel %vm659, %v661, %v657
        %v663 = vmul.f32 1.0, %v662
        %v664 = vld [vmem:[%s271] sm:$0xf]
        %v665 = vld [vmem:[%s271 + $0x4] sm:$0xf]
        %v666 = vld [vmem:[%s271 + $0x8] sm:$0xf]
        %v667 = vld [vmem:[%s271 + $0xc] sm:$0xf]
        %v668 = vld [vmem:[%s271 + $0x10] sm:$0xf]
        %v669 = vld [vmem:[%s271 + $0x14] sm:$0xf]
        %v670 = vld [vmem:[%s271 + $0x18] sm:$0xf]
        %v671 = vld [vmem:[%s271 + $0x1c] sm:$0xf]
        %v672 = vld [vmem:[%s271 + $0x20] sm:$0xf]
        %v673 = vld [vmem:[%s271 + $0x24] sm:$0xf]
        %v674 = vld [vmem:[%s271 + $0x28] sm:$0xf]
        %v675 = vld [vmem:[%s271 + $0x2c] sm:$0xf]
        %v676 = vld [vmem:[%s271 + $0x30] sm:$0xf]
        %v677 = vld [vmem:[%s271 + $0x34] sm:$0xf]
        %v678 = vld [vmem:[%s271 + $0x38] sm:$0xf]
        %v679 = vld [vmem:[%s271 + $0x3c] sm:$0xf]
        %v680 = vld [vmem:[%s271 + $0x40] sm:$0xf]
        %v681 = vld [vmem:[%s271 + $0x44] sm:$0xf]
        %v682 = vld [vmem:[%s271 + $0x48] sm:$0xf]
        %v683 = vld [vmem:[%s271 + $0x4c] sm:$0xf]
        %v684 = vld [vmem:[%s271 + $0x50] sm:$0xf]
        %v685 = vld [vmem:[%s271 + $0x54] sm:$0xf]
        %v686 = vld [vmem:[%s271 + $0x58] sm:$0xf]
        %v687 = vld [vmem:[%s271 + $0x5c] sm:$0xf]
        %v688 = vld [vmem:[%s271 + $0x60] sm:$0xf]
        %v689 = vld [vmem:[%s271 + $0x64] sm:$0xf]
        %v690 = vld [vmem:[%s271 + $0x68] sm:$0xf]
        %v691 = vld [vmem:[%s271 + $0x6c] sm:$0xf]
        %v692 = vld [vmem:[%s271 + $0x70] sm:$0xf]
        %v693 = vld [vmem:[%s271 + $0x74] sm:$0xf]
        %v694 = vld [vmem:[%s271 + $0x78] sm:$0xf]
        %v695 = vld [vmem:[%s271 + $0x7c] sm:$0xf]
        %v696 = vld [vmem:[%s280] sm:$0x1]
        %p697 = scmp.eq.s32.totalorder %s27, 0
        // Predicated region
        $region53: #{tpu_custom_call.1} parent=35 // pred_check
          %p698 = pneg %p697
        $region54: #{tpu_custom_call.1} parent=35 // pred_check_branch
          %700 = sbr.rel (%p698) target = $region56
        $region55: #{tpu_custom_call.1} parent=35 // pred_region
          %v701 = vld [vmem:[#allocation4] sm:$0xf]
          %v702 = vld [vmem:[#allocation4 + $0x4] sm:$0xf]
          %v703 = vld [vmem:[#allocation4 + $0x8] sm:$0xf]
          %v704 = vld [vmem:[#allocation4 + $0xc] sm:$0xf]
          %v705 = vld [vmem:[#allocation4 + $0x10] sm:$0xf]
          %v706 = vld [vmem:[#allocation4 + $0x14] sm:$0xf]
          %v707 = vld [vmem:[#allocation4 + $0x18] sm:$0xf]
          %v708 = vld [vmem:[#allocation4 + $0x1c] sm:$0xf]
          %v709 = vld [vmem:[#allocation4 + $0x20] sm:$0xf]
          %v710 = vld [vmem:[#allocation4 + $0x24] sm:$0xf]
          %v711 = vld [vmem:[#allocation4 + $0x28] sm:$0xf]
          %v712 = vld [vmem:[#allocation4 + $0x2c] sm:$0xf]
          %v713 = vld [vmem:[#allocation4 + $0x30] sm:$0xf]
          %v714 = vld [vmem:[#allocation4 + $0x34] sm:$0xf]
          %v715 = vld [vmem:[#allocation4 + $0x38] sm:$0xf]
          %v716 = vld [vmem:[#allocation4 + $0x3c] sm:$0xf]
          %v717 = vld [vmem:[#allocation4 + $0x40] sm:$0xf]
          %v718 = vld [vmem:[#allocation4 + $0x44] sm:$0xf]
          %v719 = vld [vmem:[#allocation4 + $0x48] sm:$0xf]
          %v720 = vld [vmem:[#allocation4 + $0x4c] sm:$0xf]
          %v721 = vld [vmem:[#allocation4 + $0x50] sm:$0xf]
          %v722 = vld [vmem:[#allocation4 + $0x54] sm:$0xf]
          %v723 = vld [vmem:[#allocation4 + $0x58] sm:$0xf]
          %v724 = vld [vmem:[#allocation4 + $0x5c] sm:$0xf]
          %v725 = vld [vmem:[#allocation4 + $0x60] sm:$0xf]
          %v726 = vld [vmem:[#allocation4 + $0x64] sm:$0xf]
          %v727 = vld [vmem:[#allocation4 + $0x68] sm:$0xf]
          %v728 = vld [vmem:[#allocation4 + $0x6c] sm:$0xf]
          %v729 = vld [vmem:[#allocation4 + $0x70] sm:$0xf]
          %v730 = vld [vmem:[#allocation4 + $0x74] sm:$0xf]
          %v731 = vld [vmem:[#allocation4 + $0x78] sm:$0xf]
          %v732 = vld [vmem:[#allocation4 + $0x7c] sm:$0xf]
          %s733 = sshra.s32 %s311, 3
          %s734 = sand.u32 %s311, 7
          %s735 = smul.addr %s733, 4
          %s736 = scalar_lea.vmem [#allocation4], %s735
          %v737 = vld [vmem:[%s736] sm:$0xf]
          %v738 = vld [vmem:[%s736 + $0x4] sm:$0xf]
          %v739 = vld [vmem:[%s736 + $0x8] sm:$0xf]
          %v740 = vld [vmem:[%s736 + $0xc] sm:$0xf]
          %v741 = vld [vmem:[%s736 + $0x10] sm:$0xf]
          %v742 = vld [vmem:[%s736 + $0x14] sm:$0xf]
          %v743 = vld [vmem:[%s736 + $0x18] sm:$0xf]
          %v744 = vld [vmem:[%s736 + $0x1c] sm:$0xf]
          %v745 = vld [vmem:[%s736 + $0x20] sm:$0xf]
          %v746 = vld [vmem:[%s736 + $0x24] sm:$0xf]
          %v747 = vld [vmem:[%s736 + $0x28] sm:$0xf]
          %v748 = vld [vmem:[%s736 + $0x2c] sm:$0xf]
          %v749 = vld [vmem:[%s736 + $0x30] sm:$0xf]
          %v750 = vld [vmem:[%s736 + $0x34] sm:$0xf]
          %v751 = vld [vmem:[%s736 + $0x38] sm:$0xf]
          %v752 = vld [vmem:[%s736 + $0x3c] sm:$0xf]
          %v769 = vunpack.c.l.b16 %v312
          %v770 = vunpack.c.h.b16 %v312
          %v771 = vunpack.c.l.b16 %v313
          %v772 = vunpack.c.h.b16 %v313
          %v773 = vunpack.c.l.b16 %v314
          %v774 = vunpack.c.h.b16 %v314
          %v775 = vunpack.c.l.b16 %v315
          %v776 = vunpack.c.h.b16 %v315
          %v777 = vunpack.c.l.b16 %v316
          %v778 = vunpack.c.h.b16 %v316
          %v779 = vunpack.c.l.b16 %v317
          %v780 = vunpack.c.h.b16 %v317
          %v781 = vunpack.c.l.b16 %v318
          %v782 = vunpack.c.h.b16 %v318
          %v783 = vunpack.c.l.b16 %v319
          %v784 = vunpack.c.h.b16 %v319
          %v785 = vunpack.c.l.b16 %v320
          %v786 = vunpack.c.h.b16 %v320
          %v787 = vunpack.c.l.b16 %v321
          %v788 = vunpack.c.h.b16 %v321
          %v789 = vunpack.c.l.b16 %v322
          %v790 = vunpack.c.h.b16 %v322
          %v791 = vunpack.c.l.b16 %v323
          %v792 = vunpack.c.h.b16 %v323
          %v793 = vunpack.c.l.b16 %v324
          %v794 = vunpack.c.h.b16 %v324
          %v795 = vunpack.c.l.b16 %v325
          %v796 = vunpack.c.h.b16 %v325
          %v797 = vunpack.c.l.b16 %v326
          %v798 = vunpack.c.h.b16 %v326
          %v799 = vunpack.c.l.b16 %v327
          %v800 = vunpack.c.h.b16 %v327
          %v801 = vpack.c.b16 %v771, %v769
          %v802 = vpack.c.b16 %v772, %v770
          %v803 = vpack.c.b16 %v775, %v773
          %v804 = vpack.c.b16 %v776, %v774
          %v805 = vpack.c.b16 %v779, %v777
          %v806 = vpack.c.b16 %v780, %v778
          %v807 = vpack.c.b16 %v783, %v781
          %v808 = vpack.c.b16 %v784, %v782
          %v809 = vpack.c.b16 %v787, %v785
          %v810 = vpack.c.b16 %v788, %v786
          %v811 = vpack.c.b16 %v791, %v789
          %v812 = vpack.c.b16 %v792, %v790
          %v813 = vpack.c.b16 %v795, %v793
          %v814 = vpack.c.b16 %v796, %v794
          %v815 = vpack.c.b16 %v799, %v797
          %v816 = vpack.c.b16 %v800, %v798
          %v865 = vunpack.c.l.b16 %v701
          %v866 = vunpack.c.l.b16 %v702
          %v867 = vunpack.c.l.b16 %v703
          %v868 = vunpack.c.l.b16 %v704
          %v869 = vunpack.c.l.b16 %v705
          %v870 = vunpack.c.l.b16 %v706
          %v871 = vunpack.c.l.b16 %v707
          %v872 = vunpack.c.l.b16 %v708
          %v873 = vunpack.c.l.b16 %v709
          %v874 = vunpack.c.l.b16 %v710
          %v875 = vunpack.c.l.b16 %v711
          %v876 = vunpack.c.l.b16 %v712
          %v877 = vunpack.c.l.b16 %v713
          %v878 = vunpack.c.l.b16 %v714
          %v879 = vunpack.c.l.b16 %v715
          %v880 = vunpack.c.l.b16 %v716
          %v881 = vunpack.c.l.b16 %v717
          %v882 = vunpack.c.l.b16 %v718
          %v883 = vunpack.c.l.b16 %v719
          %v884 = vunpack.c.l.b16 %v720
          %v885 = vunpack.c.l.b16 %v721
          %v886 = vunpack.c.l.b16 %v722
          %v887 = vunpack.c.l.b16 %v723
          %v888 = vunpack.c.l.b16 %v724
          %v889 = vunpack.c.l.b16 %v725
          %v890 = vunpack.c.l.b16 %v726
          %v891 = vunpack.c.l.b16 %v727
          %v892 = vunpack.c.l.b16 %v728
          %v893 = vunpack.c.l.b16 %v729
          %v894 = vunpack.c.l.b16 %v730
          %v895 = vunpack.c.l.b16 %v731
          %v896 = vunpack.c.l.b16 %v732
          %v897 = vpack.c.b16 %v866, %v865
          %v898 = vpack.c.b16 %v868, %v867
          %v899 = vpack.c.b16 %v870, %v869
          %v900 = vpack.c.b16 %v872, %v871
          %v901 = vpack.c.b16 %v874, %v873
          %v902 = vpack.c.b16 %v876, %v875
          %v903 = vpack.c.b16 %v878, %v877
          %v904 = vpack.c.b16 %v880, %v879
          %v905 = vpack.c.b16 %v882, %v881
          %v906 = vpack.c.b16 %v884, %v883
          %v907 = vpack.c.b16 %v886, %v885
          %v908 = vpack.c.b16 %v888, %v887
          %v909 = vpack.c.b16 %v890, %v889
          %v910 = vpack.c.b16 %v892, %v891
          %v911 = vpack.c.b16 %v894, %v893
          %v912 = vpack.c.b16 %v896, %v895
          %929 = vmatpush.bf16.msra.mxu0 %v904
          %930 = vmatpush.bf16.msra.mxu0 %v903
          %931 = vmatpush.bf16.msra.mxu0 %v902
          %932 = vmatpush.bf16.msra.mxu0 %v901
          %933 = vmatpush.bf16.msra.mxu0 %v900
          %934 = vmatpush.bf16.msra.mxu0 %v899
          %935 = vmatpush.bf16.msra.mxu0 %v898
          %936 = vmatpush.bf16.msra.mxu0 %v897
          %937 = vmatmul.bf16.gmra.mxu0 %v801
          %v938 = vpop.f32.mrf.mxu0
          %v939 = vadd.f32 0.0, %v938
          %v940 = vpop.f32.mrf.mxu0
          %v941 = vadd.f32 0.0, %v940
          %942 = vmatmul.bf16.gmra.mxu0 %v803
          %v943 = vpop.f32.mrf.mxu0
          %v944 = vadd.f32 0.0, %v943
          %v945 = vpop.f32.mrf.mxu0
          %v946 = vadd.f32 0.0, %v945
          %947 = vmatmul.bf16.gmra.mxu0 %v805
          %v948 = vpop.f32.mrf.mxu0
          %v949 = vadd.f32 0.0, %v948
          %v950 = vpop.f32.mrf.mxu0
          %v951 = vadd.f32 0.0, %v950
          %952 = vmatmul.bf16.gmra.mxu0 %v807
          %v953 = vpop.f32.mrf.mxu0
          %v954 = vadd.f32 0.0, %v953
          %v955 = vpop.f32.mrf.mxu0
          %v956 = vadd.f32 0.0, %v955
          %957 = vmatmul.bf16.gmra.mxu0 %v809
          %v958 = vpop.f32.mrf.mxu0
          %v959 = vadd.f32 0.0, %v958
          %v960 = vpop.f32.mrf.mxu0
          %v961 = vadd.f32 0.0, %v960
          %962 = vmatmul.bf16.gmra.mxu0 %v811
          %v963 = vpop.f32.mrf.mxu0
          %v964 = vadd.f32 0.0, %v963
          %v965 = vpop.f32.mrf.mxu0
          %v966 = vadd.f32 0.0, %v965
          %967 = vmatmul.bf16.gmra.mxu0 %v813
          %v968 = vpop.f32.mrf.mxu0
          %v969 = vadd.f32 0.0, %v968
          %v970 = vpop.f32.mrf.mxu0
          %v971 = vadd.f32 0.0, %v970
          %972 = vmatmul.bf16.gmra.mxu0 %v815
          %v973 = vpop.f32.mrf.mxu0
          %v974 = vadd.f32 0.0, %v973
          %v975 = vpop.f32.mrf.mxu0
          %v976 = vadd.f32 0.0, %v975
          %977 = vdwg.mxu0
          %978 = vmatpush.bf16.msra.mxu0 %v912
          %979 = vmatpush.bf16.msra.mxu0 %v911
          %980 = vmatpush.bf16.msra.mxu0 %v910
          %981 = vmatpush.bf16.msra.mxu0 %v909
          %982 = vmatpush.bf16.msra.mxu0 %v908
          %983 = vmatpush.bf16.msra.mxu0 %v907
          %984 = vmatpush.bf16.msra.mxu0 %v906
          %985 = vmatpush.bf16.msra.mxu0 %v905
          %986 = vmatmul.bf16.gmra.mxu0 %v802
          %v987 = vpop.f32.mrf.mxu0
          %v988 = vadd.f32 %v939, %v987
          %v989 = vpop.f32.mrf.mxu0
          %v990 = vadd.f32 %v941, %v989
          %991 = vmatmul.bf16.gmra.mxu0 %v804
          %v992 = vpop.f32.mrf.mxu0
          %v993 = vadd.f32 %v944, %v992
          %v994 = vpop.f32.mrf.mxu0
          %v995 = vadd.f32 %v946, %v994
          %996 = vmatmul.bf16.gmra.mxu0 %v806
          %v997 = vpop.f32.mrf.mxu0
          %v998 = vadd.f32 %v949, %v997
          %v999 = vpop.f32.mrf.mxu0
          %v1000 = vadd.f32 %v951, %v999
          %1001 = vmatmul.bf16.gmra.mxu0 %v808
          %v1002 = vpop.f32.mrf.mxu0
          %v1003 = vadd.f32 %v954, %v1002
          %v1004 = vpop.f32.mrf.mxu0
          %v1005 = vadd.f32 %v956, %v1004
          %1006 = vmatmul.bf16.gmra.mxu0 %v810
          %v1007 = vpop.f32.mrf.mxu0
          %v1008 = vadd.f32 %v959, %v1007
          %v1009 = vpop.f32.mrf.mxu0
          %v1010 = vadd.f32 %v961, %v1009
          %1011 = vmatmul.bf16.gmra.mxu0 %v812
          %v1012 = vpop.f32.mrf.mxu0
          %v1013 = vadd.f32 %v964, %v1012
          %v1014 = vpop.f32.mrf.mxu0
          %v1015 = vadd.f32 %v966, %v1014
          %1016 = vmatmul.bf16.gmra.mxu0 %v814
          %v1017 = vpop.f32.mrf.mxu0
          %v1018 = vadd.f32 %v969, %v1017
          %v1019 = vpop.f32.mrf.mxu0
          %v1020 = vadd.f32 %v971, %v1019
          %1021 = vmatmul.bf16.gmra.mxu0 %v816
          %v1022 = vpop.f32.mrf.mxu0
          %v1023 = vadd.f32 %v974, %v1022
          %v1024 = vpop.f32.mrf.mxu0
          %v1025 = vadd.f32 %v976, %v1024
          %1026 = vdwg.mxu0
          %v1027 = vmul.f32 %v988, %v438
          %v1028 = vmul.f32 %v990, %v453
          %v1029 = vmul.f32 %v993, %v468
          %v1030 = vmul.f32 %v995, %v483
          %v1031 = vmul.f32 %v998, %v498
          %v1032 = vmul.f32 %v1000, %v513
          %v1033 = vmul.f32 %v1003, %v528
          %v1034 = vmul.f32 %v1005, %v543
          %v1035 = vmul.f32 %v1008, %v558
          %v1036 = vmul.f32 %v1010, %v573
          %v1037 = vmul.f32 %v1013, %v588
          %v1038 = vmul.f32 %v1015, %v603
          %v1039 = vmul.f32 %v1018, %v618
          %v1040 = vmul.f32 %v1020, %v633
          %v1041 = vmul.f32 %v1023, %v648
          %v1042 = vmul.f32 %v1025, %v663
          %v1043 = vpack.c.bf16 %v1027, %v1027
          %v1044 = vpack.c.bf16 %v1028, %v1028
          %v1045 = vpack.c.bf16 %v1029, %v1029
          %v1046 = vpack.c.bf16 %v1030, %v1030
          %v1047 = vpack.c.bf16 %v1031, %v1031
          %v1048 = vpack.c.bf16 %v1032, %v1032
          %v1049 = vpack.c.bf16 %v1033, %v1033
          %v1050 = vpack.c.bf16 %v1034, %v1034
          %v1051 = vpack.c.bf16 %v1035, %v1035
          %v1052 = vpack.c.bf16 %v1036, %v1036
          %v1053 = vpack.c.bf16 %v1037, %v1037
          %v1054 = vpack.c.bf16 %v1038, %v1038
          %v1055 = vpack.c.bf16 %v1039, %v1039
          %v1056 = vpack.c.bf16 %v1040, %v1040
          %v1057 = vpack.c.bf16 %v1041, %v1041
          %v1058 = vpack.c.bf16 %v1042, %v1042
          %v1075 = vunpack.c.l.b16 %v737
          %v1076 = vunpack.c.l.b16 %v738
          %v1077 = vunpack.c.l.b16 %v739
          %v1078 = vunpack.c.l.b16 %v740
          %v1079 = vunpack.c.l.b16 %v741
          %v1080 = vunpack.c.l.b16 %v742
          %v1081 = vunpack.c.l.b16 %v743
          %v1082 = vunpack.c.l.b16 %v744
          %v1083 = vunpack.c.l.b16 %v745
          %v1084 = vunpack.c.l.b16 %v746
          %v1085 = vunpack.c.l.b16 %v747
          %v1086 = vunpack.c.l.b16 %v748
          %v1087 = vunpack.c.l.b16 %v749
          %v1088 = vunpack.c.l.b16 %v750
          %v1089 = vunpack.c.l.b16 %v751
          %v1090 = vunpack.c.l.b16 %v752
          %v1091 = vpack.c.b16 %v1076, %v1075
          %v1092 = vpack.c.b16 %v1078, %v1077
          %v1093 = vpack.c.b16 %v1080, %v1079
          %v1094 = vpack.c.b16 %v1082, %v1081
          %v1095 = vpack.c.b16 %v1084, %v1083
          %v1096 = vpack.c.b16 %v1086, %v1085
          %v1097 = vpack.c.b16 %v1088, %v1087
          %v1098 = vpack.c.b16 %v1090, %v1089
          %v1123 = vunpack.c.l.b16 %v1043
          %v1124 = vunpack.c.l.b16 %v1044
          %v1125 = vunpack.c.l.b16 %v1045
          %v1126 = vunpack.c.l.b16 %v1046
          %v1127 = vunpack.c.l.b16 %v1047
          %v1128 = vunpack.c.l.b16 %v1048
          %v1129 = vunpack.c.l.b16 %v1049
          %v1130 = vunpack.c.l.b16 %v1050
          %v1131 = vunpack.c.l.b16 %v1051
          %v1132 = vunpack.c.l.b16 %v1052
          %v1133 = vunpack.c.l.b16 %v1053
          %v1134 = vunpack.c.l.b16 %v1054
          %v1135 = vunpack.c.l.b16 %v1055
          %v1136 = vunpack.c.l.b16 %v1056
          %v1137 = vunpack.c.l.b16 %v1057
          %v1138 = vunpack.c.l.b16 %v1058
          %v1139 = vpack.c.b16 %v1124, %v1123
          %v1140 = vpack.c.b16 %v1126, %v1125
          %v1141 = vpack.c.b16 %v1128, %v1127
          %v1142 = vpack.c.b16 %v1130, %v1129
          %v1143 = vpack.c.b16 %v1132, %v1131
          %v1144 = vpack.c.b16 %v1134, %v1133
          %v1145 = vpack.c.b16 %v1136, %v1135
          %v1146 = vpack.c.b16 %v1138, %v1137
          %v1156 = vperm.slane %v696, 0
          %v1190 = vunpack.c.l.b16 %v664
          %v1191 = vunpack.c.l.b16 %v665
          %v1192 = vunpack.c.l.b16 %v666
          %v1193 = vunpack.c.l.b16 %v667
          %v1194 = vunpack.c.l.b16 %v668
          %v1195 = vunpack.c.l.b16 %v669
          %v1196 = vunpack.c.l.b16 %v670
          %v1197 = vunpack.c.l.b16 %v671
          %v1198 = vunpack.c.l.b16 %v672
          %v1199 = vunpack.c.l.b16 %v673
          %v1200 = vunpack.c.l.b16 %v674
          %v1201 = vunpack.c.l.b16 %v675
          %v1202 = vunpack.c.l.b16 %v676
          %v1203 = vunpack.c.l.b16 %v677
          %v1204 = vunpack.c.l.b16 %v678
          %v1205 = vunpack.c.l.b16 %v679
          %v1206 = vunpack.c.l.b16 %v680
          %v1207 = vunpack.c.l.b16 %v681
          %v1208 = vunpack.c.l.b16 %v682
          %v1209 = vunpack.c.l.b16 %v683
          %v1210 = vunpack.c.l.b16 %v684
          %v1211 = vunpack.c.l.b16 %v685
          %v1212 = vunpack.c.l.b16 %v686
          %v1213 = vunpack.c.l.b16 %v687
          %v1214 = vunpack.c.l.b16 %v688
          %v1215 = vunpack.c.l.b16 %v689
          %v1216 = vunpack.c.l.b16 %v690
          %v1217 = vunpack.c.l.b16 %v691
          %v1218 = vunpack.c.l.b16 %v692
          %v1219 = vunpack.c.l.b16 %v693
          %v1220 = vunpack.c.l.b16 %v694
          %v1221 = vunpack.c.l.b16 %v695
          %v1222 = vpack.c.b16 %v1191, %v1190
          %v1223 = vpack.c.b16 %v1193, %v1192
          %v1224 = vpack.c.b16 %v1195, %v1194
          %v1225 = vpack.c.b16 %v1197, %v1196
          %v1226 = vpack.c.b16 %v1199, %v1198
          %v1227 = vpack.c.b16 %v1201, %v1200
          %v1228 = vpack.c.b16 %v1203, %v1202
          %v1229 = vpack.c.b16 %v1205, %v1204
          %v1230 = vpack.c.b16 %v1207, %v1206
          %v1231 = vpack.c.b16 %v1209, %v1208
          %v1232 = vpack.c.b16 %v1211, %v1210
          %v1233 = vpack.c.b16 %v1213, %v1212
          %v1234 = vpack.c.b16 %v1215, %v1214
          %v1235 = vpack.c.b16 %v1217, %v1216
          %v1236 = vpack.c.b16 %v1219, %v1218
          %v1237 = vpack.c.b16 %v1221, %v1220
          %1254 = vmatpush.bf16.msra.mxu0 %v1229
          %1255 = vmatpush.bf16.msra.mxu0 %v1228
          %1256 = vmatpush.bf16.msra.mxu0 %v1227
          %1257 = vmatpush.bf16.msra.mxu0 %v1226
          %1258 = vmatpush.bf16.msra.mxu0 %v1225
          %1259 = vmatpush.bf16.msra.mxu0 %v1224
          %1260 = vmatpush.bf16.msra.mxu0 %v1223
          %1261 = vmatpush.bf16.msra.mxu0 %v1222
          %1262 = vmatmul.bf16.gmra.mxu0 %v1091
          %v1263 = vpop.f32.mrf.mxu0
          %v1264 = vadd.f32 %v1156, %v1263
          %v1265 = vpop.f32.mrf.mxu0
          %v1266 = vadd.f32 %v1156, %v1265
          %1267 = vmatmul.bf16.gmra.mxu0 %v1092
          %v1268 = vpop.f32.mrf.mxu0
          %v1269 = vadd.f32 %v1156, %v1268
          %v1270 = vpop.f32.mrf.mxu0
          %v1271 = vadd.f32 %v1156, %v1270
          %1272 = vmatmul.bf16.gmra.mxu0 %v1093
          %v1273 = vpop.f32.mrf.mxu0
          %v1274 = vadd.f32 %v1156, %v1273
          %v1275 = vpop.f32.mrf.mxu0
          %v1276 = vadd.f32 %v1156, %v1275
          %1277 = vmatmul.bf16.gmra.mxu0 %v1094
          %v1278 = vpop.f32.mrf.mxu0
          %v1279 = vadd.f32 %v1156, %v1278
          %v1280 = vpop.f32.mrf.mxu0
          %v1281 = vadd.f32 %v1156, %v1280
          %1282 = vmatmul.bf16.gmra.mxu0 %v1095
          %v1283 = vpop.f32.mrf.mxu0
          %v1284 = vadd.f32 %v1156, %v1283
          %v1285 = vpop.f32.mrf.mxu0
          %v1286 = vadd.f32 %v1156, %v1285
          %1287 = vmatmul.bf16.gmra.mxu0 %v1096
          %v1288 = vpop.f32.mrf.mxu0
          %v1289 = vadd.f32 %v1156, %v1288
          %v1290 = vpop.f32.mrf.mxu0
          %v1291 = vadd.f32 %v1156, %v1290
          %1292 = vmatmul.bf16.gmra.mxu0 %v1097
          %v1293 = vpop.f32.mrf.mxu0
          %v1294 = vadd.f32 %v1156, %v1293
          %v1295 = vpop.f32.mrf.mxu0
          %v1296 = vadd.f32 %v1156, %v1295
          %1297 = vmatmul.bf16.gmra.mxu0 %v1098
          %v1298 = vpop.f32.mrf.mxu0
          %v1299 = vadd.f32 %v1156, %v1298
          %v1300 = vpop.f32.mrf.mxu0
          %v1301 = vadd.f32 %v1156, %v1300
          %1302 = vdwg.mxu0
          %1303 = vmatpush.bf16.msra.mxu0 %v1237
          %1304 = vmatpush.bf16.msra.mxu0 %v1236
          %1305 = vmatpush.bf16.msra.mxu0 %v1235
          %1306 = vmatpush.bf16.msra.mxu0 %v1234
          %1307 = vmatpush.bf16.msra.mxu0 %v1233
          %1308 = vmatpush.bf16.msra.mxu0 %v1232
          %1309 = vmatpush.bf16.msra.mxu0 %v1231
          %1310 = vmatpush.bf16.msra.mxu0 %v1230
          %1311 = vmatmul.bf16.gmra.mxu0 %v1139
          %v1312 = vpop.f32.mrf.mxu0
          %v1313 = vadd.f32 %v1264, %v1312
          %v1314 = vpop.f32.mrf.mxu0
          %v1315 = vadd.f32 %v1266, %v1314
          %1316 = vmatmul.bf16.gmra.mxu0 %v1140
          %v1317 = vpop.f32.mrf.mxu0
          %v1318 = vadd.f32 %v1269, %v1317
          %v1319 = vpop.f32.mrf.mxu0
          %v1320 = vadd.f32 %v1271, %v1319
          %1321 = vmatmul.bf16.gmra.mxu0 %v1141
          %v1322 = vpop.f32.mrf.mxu0
          %v1323 = vadd.f32 %v1274, %v1322
          %v1324 = vpop.f32.mrf.mxu0
          %v1325 = vadd.f32 %v1276, %v1324
          %1326 = vmatmul.bf16.gmra.mxu0 %v1142
          %v1327 = vpop.f32.mrf.mxu0
          %v1328 = vadd.f32 %v1279, %v1327
          %v1329 = vpop.f32.mrf.mxu0
          %v1330 = vadd.f32 %v1281, %v1329
          %1331 = vmatmul.bf16.gmra.mxu0 %v1143
          %v1332 = vpop.f32.mrf.mxu0
          %v1333 = vadd.f32 %v1284, %v1332
          %v1334 = vpop.f32.mrf.mxu0
          %v1335 = vadd.f32 %v1286, %v1334
          %1336 = vmatmul.bf16.gmra.mxu0 %v1144
          %v1337 = vpop.f32.mrf.mxu0
          %v1338 = vadd.f32 %v1289, %v1337
          %v1339 = vpop.f32.mrf.mxu0
          %v1340 = vadd.f32 %v1291, %v1339
          %1341 = vmatmul.bf16.gmra.mxu0 %v1145
          %v1342 = vpop.f32.mrf.mxu0
          %v1343 = vadd.f32 %v1294, %v1342
          %v1344 = vpop.f32.mrf.mxu0
          %v1345 = vadd.f32 %v1296, %v1344
          %1346 = vmatmul.bf16.gmra.mxu0 %v1146
          %v1347 = vpop.f32.mrf.mxu0
          %v1348 = vadd.f32 %v1299, %v1347
          %v1349 = vpop.f32.mrf.mxu0
          %v1350 = vadd.f32 %v1301, %v1349
          %1351 = vdwg.mxu0
          %v1352 = vmax.f32 %v1313, 0.0
          %v1353 = vmax.f32 %v1315, 0.0
          %v1354 = vmax.f32 %v1318, 0.0
          %v1355 = vmax.f32 %v1320, 0.0
          %v1356 = vmax.f32 %v1323, 0.0
          %v1357 = vmax.f32 %v1325, 0.0
          %v1358 = vmax.f32 %v1328, 0.0
          %v1359 = vmax.f32 %v1330, 0.0
          %v1360 = vmax.f32 %v1333, 0.0
          %v1361 = vmax.f32 %v1335, 0.0
          %v1362 = vmax.f32 %v1338, 0.0
          %v1363 = vmax.f32 %v1340, 0.0
          %v1364 = vmax.f32 %v1343, 0.0
          %v1365 = vmax.f32 %v1345, 0.0
          %v1366 = vmax.f32 %v1348, 0.0
          %v1367 = vmax.f32 %v1350, 0.0
          %v1368 = vpack.c.bf16 %v1352, %v1352
          %v1369 = vpack.c.bf16 %v1353, %v1353
          %v1370 = vpack.c.bf16 %v1354, %v1354
          %v1371 = vpack.c.bf16 %v1355, %v1355
          %v1372 = vpack.c.bf16 %v1356, %v1356
          %v1373 = vpack.c.bf16 %v1357, %v1357
          %v1374 = vpack.c.bf16 %v1358, %v1358
          %v1375 = vpack.c.bf16 %v1359, %v1359
          %v1376 = vpack.c.bf16 %v1360, %v1360
          %v1377 = vpack.c.bf16 %v1361, %v1361
          %v1378 = vpack.c.bf16 %v1362, %v1362
          %v1379 = vpack.c.bf16 %v1363, %v1363
          %v1380 = vpack.c.bf16 %v1364, %v1364
          %v1381 = vpack.c.bf16 %v1365, %v1365
          %v1382 = vpack.c.bf16 %v1366, %v1366
          %v1383 = vpack.c.bf16 %v1367, %v1367
          %s1384 = smul.addr %s733, 4
          %s1385 = scalar_lea.vmem [#allocation2], %s1384
          %1386 = vst [vmem:[%s1385] sm:$0xf] %v1368
          %1387 = vst [vmem:[%s1385 + $0x4] sm:$0xf] %v1369
          %1388 = vst [vmem:[%s1385 + $0x8] sm:$0xf] %v1370
          %1389 = vst [vmem:[%s1385 + $0xc] sm:$0xf] %v1371
          %1390 = vst [vmem:[%s1385 + $0x10] sm:$0xf] %v1372
          %1391 = vst [vmem:[%s1385 + $0x14] sm:$0xf] %v1373
          %1392 = vst [vmem:[%s1385 + $0x18] sm:$0xf] %v1374
          %1393 = vst [vmem:[%s1385 + $0x1c] sm:$0xf] %v1375
          %1394 = vst [vmem:[%s1385 + $0x20] sm:$0xf] %v1376
          %1395 = vst [vmem:[%s1385 + $0x24] sm:$0xf] %v1377
          %1396 = vst [vmem:[%s1385 + $0x28] sm:$0xf] %v1378
          %1397 = vst [vmem:[%s1385 + $0x2c] sm:$0xf] %v1379
          %1398 = vst [vmem:[%s1385 + $0x30] sm:$0xf] %v1380
          %1399 = vst [vmem:[%s1385 + $0x34] sm:$0xf] %v1381
          %1400 = vst [vmem:[%s1385 + $0x38] sm:$0xf] %v1382
          %1401 = vst [vmem:[%s1385 + $0x3c] sm:$0xf] %v1383
        $region56: #{tpu_custom_call.1} parent=35 // pred_fallthru
          _
        %p1402 = scmp.eq.s32.totalorder %s27, 1
        // Predicated region
        $region57: #{tpu_custom_call.1} parent=35 // pred_check
          %p1403 = pneg %p1402
        $region58: #{tpu_custom_call.1} parent=35 // pred_check_branch
          %1405 = sbr.rel (%p1403) target = $region60
        $region59: #{tpu_custom_call.1} parent=35 // pred_region
          %v1406 = vld [vmem:[#allocation2] sm:$0xf]
          %v1407 = vld [vmem:[#allocation2 + $0x4] sm:$0xf]
          %v1408 = vld [vmem:[#allocation2 + $0x8] sm:$0xf]
          %v1409 = vld [vmem:[#allocation2 + $0xc] sm:$0xf]
          %v1410 = vld [vmem:[#allocation2 + $0x10] sm:$0xf]
          %v1411 = vld [vmem:[#allocation2 + $0x14] sm:$0xf]
          %v1412 = vld [vmem:[#allocation2 + $0x18] sm:$0xf]
          %v1413 = vld [vmem:[#allocation2 + $0x1c] sm:$0xf]
          %v1414 = vld [vmem:[#allocation2 + $0x20] sm:$0xf]
          %v1415 = vld [vmem:[#allocation2 + $0x24] sm:$0xf]
          %v1416 = vld [vmem:[#allocation2 + $0x28] sm:$0xf]
          %v1417 = vld [vmem:[#allocation2 + $0x2c] sm:$0xf]
          %v1418 = vld [vmem:[#allocation2 + $0x30] sm:$0xf]
          %v1419 = vld [vmem:[#allocation2 + $0x34] sm:$0xf]
          %v1420 = vld [vmem:[#allocation2 + $0x38] sm:$0xf]
          %v1421 = vld [vmem:[#allocation2 + $0x3c] sm:$0xf]
          %v1422 = vld [vmem:[#allocation2 + $0x40] sm:$0xf]
          %v1423 = vld [vmem:[#allocation2 + $0x44] sm:$0xf]
          %v1424 = vld [vmem:[#allocation2 + $0x48] sm:$0xf]
          %v1425 = vld [vmem:[#allocation2 + $0x4c] sm:$0xf]
          %v1426 = vld [vmem:[#allocation2 + $0x50] sm:$0xf]
          %v1427 = vld [vmem:[#allocation2 + $0x54] sm:$0xf]
          %v1428 = vld [vmem:[#allocation2 + $0x58] sm:$0xf]
          %v1429 = vld [vmem:[#allocation2 + $0x5c] sm:$0xf]
          %v1430 = vld [vmem:[#allocation2 + $0x60] sm:$0xf]
          %v1431 = vld [vmem:[#allocation2 + $0x64] sm:$0xf]
          %v1432 = vld [vmem:[#allocation2 + $0x68] sm:$0xf]
          %v1433 = vld [vmem:[#allocation2 + $0x6c] sm:$0xf]
          %v1434 = vld [vmem:[#allocation2 + $0x70] sm:$0xf]
          %v1435 = vld [vmem:[#allocation2 + $0x74] sm:$0xf]
          %v1436 = vld [vmem:[#allocation2 + $0x78] sm:$0xf]
          %v1437 = vld [vmem:[#allocation2 + $0x7c] sm:$0xf]
          %s1438 = sshra.s32 %s311, 3
          %s1439 = sand.u32 %s311, 7
          %s1440 = smul.addr %s1438, 4
          %s1441 = scalar_lea.vmem [#allocation2], %s1440
          %v1442 = vld [vmem:[%s1441] sm:$0xf]
          %v1443 = vld [vmem:[%s1441 + $0x4] sm:$0xf]
          %v1444 = vld [vmem:[%s1441 + $0x8] sm:$0xf]
          %v1445 = vld [vmem:[%s1441 + $0xc] sm:$0xf]
          %v1446 = vld [vmem:[%s1441 + $0x10] sm:$0xf]
          %v1447 = vld [vmem:[%s1441 + $0x14] sm:$0xf]
          %v1448 = vld [vmem:[%s1441 + $0x18] sm:$0xf]
          %v1449 = vld [vmem:[%s1441 + $0x1c] sm:$0xf]
          %v1450 = vld [vmem:[%s1441 + $0x20] sm:$0xf]
          %v1451 = vld [vmem:[%s1441 + $0x24] sm:$0xf]
          %v1452 = vld [vmem:[%s1441 + $0x28] sm:$0xf]
          %v1453 = vld [vmem:[%s1441 + $0x2c] sm:$0xf]
          %v1454 = vld [vmem:[%s1441 + $0x30] sm:$0xf]
          %v1455 = vld [vmem:[%s1441 + $0x34] sm:$0xf]
          %v1456 = vld [vmem:[%s1441 + $0x38] sm:$0xf]
          %v1457 = vld [vmem:[%s1441 + $0x3c] sm:$0xf]
          %v1474 = vunpack.c.l.b16 %v312
          %v1475 = vunpack.c.h.b16 %v312
          %v1476 = vunpack.c.l.b16 %v313
          %v1477 = vunpack.c.h.b16 %v313
          %v1478 = vunpack.c.l.b16 %v314
          %v1479 = vunpack.c.h.b16 %v314
          %v1480 = vunpack.c.l.b16 %v315
          %v1481 = vunpack.c.h.b16 %v315
          %v1482 = vunpack.c.l.b16 %v316
          %v1483 = vunpack.c.h.b16 %v316
          %v1484 = vunpack.c.l.b16 %v317
          %v1485 = vunpack.c.h.b16 %v317
          %v1486 = vunpack.c.l.b16 %v318
          %v1487 = vunpack.c.h.b16 %v318
          %v1488 = vunpack.c.l.b16 %v319
          %v1489 = vunpack.c.h.b16 %v319
          %v1490 = vunpack.c.l.b16 %v320
          %v1491 = vunpack.c.h.b16 %v320
          %v1492 = vunpack.c.l.b16 %v321
          %v1493 = vunpack.c.h.b16 %v321
          %v1494 = vunpack.c.l.b16 %v322
          %v1495 = vunpack.c.h.b16 %v322
          %v1496 = vunpack.c.l.b16 %v323
          %v1497 = vunpack.c.h.b16 %v323
          %v1498 = vunpack.c.l.b16 %v324
          %v1499 = vunpack.c.h.b16 %v324
          %v1500 = vunpack.c.l.b16 %v325
          %v1501 = vunpack.c.h.b16 %v325
          %v1502 = vunpack.c.l.b16 %v326
          %v1503 = vunpack.c.h.b16 %v326
          %v1504 = vunpack.c.l.b16 %v327
          %v1505 = vunpack.c.h.b16 %v327
          %v1506 = vpack.c.b16 %v1476, %v1474
          %v1507 = vpack.c.b16 %v1477, %v1475
          %v1508 = vpack.c.b16 %v1480, %v1478
          %v1509 = vpack.c.b16 %v1481, %v1479
          %v1510 = vpack.c.b16 %v1484, %v1482
          %v1511 = vpack.c.b16 %v1485, %v1483
          %v1512 = vpack.c.b16 %v1488, %v1486
          %v1513 = vpack.c.b16 %v1489, %v1487
          %v1514 = vpack.c.b16 %v1492, %v1490
          %v1515 = vpack.c.b16 %v1493, %v1491
          %v1516 = vpack.c.b16 %v1496, %v1494
          %v1517 = vpack.c.b16 %v1497, %v1495
          %v1518 = vpack.c.b16 %v1500, %v1498
          %v1519 = vpack.c.b16 %v1501, %v1499
          %v1520 = vpack.c.b16 %v1504, %v1502
          %v1521 = vpack.c.b16 %v1505, %v1503
          %v1570 = vunpack.c.l.b16 %v1406
          %v1571 = vunpack.c.l.b16 %v1407
          %v1572 = vunpack.c.l.b16 %v1408
          %v1573 = vunpack.c.l.b16 %v1409
          %v1574 = vunpack.c.l.b16 %v1410
          %v1575 = vunpack.c.l.b16 %v1411
          %v1576 = vunpack.c.l.b16 %v1412
          %v1577 = vunpack.c.l.b16 %v1413
          %v1578 = vunpack.c.l.b16 %v1414
          %v1579 = vunpack.c.l.b16 %v1415
          %v1580 = vunpack.c.l.b16 %v1416
          %v1581 = vunpack.c.l.b16 %v1417
          %v1582 = vunpack.c.l.b16 %v1418
          %v1583 = vunpack.c.l.b16 %v1419
          %v1584 = vunpack.c.l.b16 %v1420
          %v1585 = vunpack.c.l.b16 %v1421
          %v1586 = vunpack.c.l.b16 %v1422
          %v1587 = vunpack.c.l.b16 %v1423
          %v1588 = vunpack.c.l.b16 %v1424
          %v1589 = vunpack.c.l.b16 %v1425
          %v1590 = vunpack.c.l.b16 %v1426
          %v1591 = vunpack.c.l.b16 %v1427
          %v1592 = vunpack.c.l.b16 %v1428
          %v1593 = vunpack.c.l.b16 %v1429
          %v1594 = vunpack.c.l.b16 %v1430
          %v1595 = vunpack.c.l.b16 %v1431
          %v1596 = vunpack.c.l.b16 %v1432
          %v1597 = vunpack.c.l.b16 %v1433
          %v1598 = vunpack.c.l.b16 %v1434
          %v1599 = vunpack.c.l.b16 %v1435
          %v1600 = vunpack.c.l.b16 %v1436
          %v1601 = vunpack.c.l.b16 %v1437
          %v1602 = vpack.c.b16 %v1571, %v1570
          %v1603 = vpack.c.b16 %v1573, %v1572
          %v1604 = vpack.c.b16 %v1575, %v1574
          %v1605 = vpack.c.b16 %v1577, %v1576
          %v1606 = vpack.c.b16 %v1579, %v1578
          %v1607 = vpack.c.b16 %v1581, %v1580
          %v1608 = vpack.c.b16 %v1583, %v1582
          %v1609 = vpack.c.b16 %v1585, %v1584
          %v1610 = vpack.c.b16 %v1587, %v1586
          %v1611 = vpack.c.b16 %v1589, %v1588
          %v1612 = vpack.c.b16 %v1591, %v1590
          %v1613 = vpack.c.b16 %v1593, %v1592
          %v1614 = vpack.c.b16 %v1595, %v1594
          %v1615 = vpack.c.b16 %v1597, %v1596
          %v1616 = vpack.c.b16 %v1599, %v1598
          %v1617 = vpack.c.b16 %v1601, %v1600
          %1634 = vmatpush.bf16.msra.mxu0 %v1609
          %1635 = vmatpush.bf16.msra.mxu0 %v1608
          %1636 = vmatpush.bf16.msra.mxu0 %v1607
          %1637 = vmatpush.bf16.msra.mxu0 %v1606
          %1638 = vmatpush.bf16.msra.mxu0 %v1605
          %1639 = vmatpush.bf16.msra.mxu0 %v1604
          %1640 = vmatpush.bf16.msra.mxu0 %v1603
          %1641 = vmatpush.bf16.msra.mxu0 %v1602
          %1642 = vmatmul.bf16.gmra.mxu0 %v1506
          %v1643 = vpop.f32.mrf.mxu0
          %v1644 = vadd.f32 0.0, %v1643
          %v1645 = vpop.f32.mrf.mxu0
          %v1646 = vadd.f32 0.0, %v1645
          %1647 = vmatmul.bf16.gmra.mxu0 %v1508
          %v1648 = vpop.f32.mrf.mxu0
          %v1649 = vadd.f32 0.0, %v1648
          %v1650 = vpop.f32.mrf.mxu0
          %v1651 = vadd.f32 0.0, %v1650
          %1652 = vmatmul.bf16.gmra.mxu0 %v1510
          %v1653 = vpop.f32.mrf.mxu0
          %v1654 = vadd.f32 0.0, %v1653
          %v1655 = vpop.f32.mrf.mxu0
          %v1656 = vadd.f32 0.0, %v1655
          %1657 = vmatmul.bf16.gmra.mxu0 %v1512
          %v1658 = vpop.f32.mrf.mxu0
          %v1659 = vadd.f32 0.0, %v1658
          %v1660 = vpop.f32.mrf.mxu0
          %v1661 = vadd.f32 0.0, %v1660
          %1662 = vmatmul.bf16.gmra.mxu0 %v1514
          %v1663 = vpop.f32.mrf.mxu0
          %v1664 = vadd.f32 0.0, %v1663
          %v1665 = vpop.f32.mrf.mxu0
          %v1666 = vadd.f32 0.0, %v1665
          %1667 = vmatmul.bf16.gmra.mxu0 %v1516
          %v1668 = vpop.f32.mrf.mxu0
          %v1669 = vadd.f32 0.0, %v1668
          %v1670 = vpop.f32.mrf.mxu0
          %v1671 = vadd.f32 0.0, %v1670
          %1672 = vmatmul.bf16.gmra.mxu0 %v1518
          %v1673 = vpop.f32.mrf.mxu0
          %v1674 = vadd.f32 0.0, %v1673
          %v1675 = vpop.f32.mrf.mxu0
          %v1676 = vadd.f32 0.0, %v1675
          %1677 = vmatmul.bf16.gmra.mxu0 %v1520
          %v1678 = vpop.f32.mrf.mxu0
          %v1679 = vadd.f32 0.0, %v1678
          %v1680 = vpop.f32.mrf.mxu0
          %v1681 = vadd.f32 0.0, %v1680
          %1682 = vdwg.mxu0
          %1683 = vmatpush.bf16.msra.mxu0 %v1617
          %1684 = vmatpush.bf16.msra.mxu0 %v1616
          %1685 = vmatpush.bf16.msra.mxu0 %v1615
          %1686 = vmatpush.bf16.msra.mxu0 %v1614
          %1687 = vmatpush.bf16.msra.mxu0 %v1613
          %1688 = vmatpush.bf16.msra.mxu0 %v1612
          %1689 = vmatpush.bf16.msra.mxu0 %v1611
          %1690 = vmatpush.bf16.msra.mxu0 %v1610
          %1691 = vmatmul.bf16.gmra.mxu0 %v1507
          %v1692 = vpop.f32.mrf.mxu0
          %v1693 = vadd.f32 %v1644, %v1692
          %v1694 = vpop.f32.mrf.mxu0
          %v1695 = vadd.f32 %v1646, %v1694
          %1696 = vmatmul.bf16.gmra.mxu0 %v1509
          %v1697 = vpop.f32.mrf.mxu0
          %v1698 = vadd.f32 %v1649, %v1697
          %v1699 = vpop.f32.mrf.mxu0
          %v1700 = vadd.f32 %v1651, %v1699
          %1701 = vmatmul.bf16.gmra.mxu0 %v1511
          %v1702 = vpop.f32.mrf.mxu0
          %v1703 = vadd.f32 %v1654, %v1702
          %v1704 = vpop.f32.mrf.mxu0
          %v1705 = vadd.f32 %v1656, %v1704
          %1706 = vmatmul.bf16.gmra.mxu0 %v1513
          %v1707 = vpop.f32.mrf.mxu0
          %v1708 = vadd.f32 %v1659, %v1707
          %v1709 = vpop.f32.mrf.mxu0
          %v1710 = vadd.f32 %v1661, %v1709
          %1711 = vmatmul.bf16.gmra.mxu0 %v1515
          %v1712 = vpop.f32.mrf.mxu0
          %v1713 = vadd.f32 %v1664, %v1712
          %v1714 = vpop.f32.mrf.mxu0
          %v1715 = vadd.f32 %v1666, %v1714
          %1716 = vmatmul.bf16.gmra.mxu0 %v1517
          %v1717 = vpop.f32.mrf.mxu0
          %v1718 = vadd.f32 %v1669, %v1717
          %v1719 = vpop.f32.mrf.mxu0
          %v1720 = vadd.f32 %v1671, %v1719
          %1721 = vmatmul.bf16.gmra.mxu0 %v1519
          %v1722 = vpop.f32.mrf.mxu0
          %v1723 = vadd.f32 %v1674, %v1722
          %v1724 = vpop.f32.mrf.mxu0
          %v1725 = vadd.f32 %v1676, %v1724
          %1726 = vmatmul.bf16.gmra.mxu0 %v1521
          %v1727 = vpop.f32.mrf.mxu0
          %v1728 = vadd.f32 %v1679, %v1727
          %v1729 = vpop.f32.mrf.mxu0
          %v1730 = vadd.f32 %v1681, %v1729
          %1731 = vdwg.mxu0
          %v1732 = vmul.f32 %v1693, %v438
          %v1733 = vmul.f32 %v1695, %v453
          %v1734 = vmul.f32 %v1698, %v468
          %v1735 = vmul.f32 %v1700, %v483
          %v1736 = vmul.f32 %v1703, %v498
          %v1737 = vmul.f32 %v1705, %v513
          %v1738 = vmul.f32 %v1708, %v528
          %v1739 = vmul.f32 %v1710, %v543
          %v1740 = vmul.f32 %v1713, %v558
          %v1741 = vmul.f32 %v1715, %v573
          %v1742 = vmul.f32 %v1718, %v588
          %v1743 = vmul.f32 %v1720, %v603
          %v1744 = vmul.f32 %v1723, %v618
          %v1745 = vmul.f32 %v1725, %v633
          %v1746 = vmul.f32 %v1728, %v648
          %v1747 = vmul.f32 %v1730, %v663
          %v1748 = vpack.c.bf16 %v1732, %v1732
          %v1749 = vpack.c.bf16 %v1733, %v1733
          %v1750 = vpack.c.bf16 %v1734, %v1734
          %v1751 = vpack.c.bf16 %v1735, %v1735
          %v1752 = vpack.c.bf16 %v1736, %v1736
          %v1753 = vpack.c.bf16 %v1737, %v1737
          %v1754 = vpack.c.bf16 %v1738, %v1738
          %v1755 = vpack.c.bf16 %v1739, %v1739
          %v1756 = vpack.c.bf16 %v1740, %v1740
          %v1757 = vpack.c.bf16 %v1741, %v1741
          %v1758 = vpack.c.bf16 %v1742, %v1742
          %v1759 = vpack.c.bf16 %v1743, %v1743
          %v1760 = vpack.c.bf16 %v1744, %v1744
          %v1761 = vpack.c.bf16 %v1745, %v1745
          %v1762 = vpack.c.bf16 %v1746, %v1746
          %v1763 = vpack.c.bf16 %v1747, %v1747
          %v1780 = vunpack.c.l.b16 %v1442
          %v1781 = vunpack.c.l.b16 %v1443
          %v1782 = vunpack.c.l.b16 %v1444
          %v1783 = vunpack.c.l.b16 %v1445
          %v1784 = vunpack.c.l.b16 %v1446
          %v1785 = vunpack.c.l.b16 %v1447
          %v1786 = vunpack.c.l.b16 %v1448
          %v1787 = vunpack.c.l.b16 %v1449
          %v1788 = vunpack.c.l.b16 %v1450
          %v1789 = vunpack.c.l.b16 %v1451
          %v1790 = vunpack.c.l.b16 %v1452
          %v1791 = vunpack.c.l.b16 %v1453
          %v1792 = vunpack.c.l.b16 %v1454
          %v1793 = vunpack.c.l.b16 %v1455
          %v1794 = vunpack.c.l.b16 %v1456
          %v1795 = vunpack.c.l.b16 %v1457
          %v1796 = vpack.c.b16 %v1781, %v1780
          %v1797 = vpack.c.b16 %v1783, %v1782
          %v1798 = vpack.c.b16 %v1785, %v1784
          %v1799 = vpack.c.b16 %v1787, %v1786
          %v1800 = vpack.c.b16 %v1789, %v1788
          %v1801 = vpack.c.b16 %v1791, %v1790
          %v1802 = vpack.c.b16 %v1793, %v1792
          %v1803 = vpack.c.b16 %v1795, %v1794
          %v1828 = vunpack.c.l.b16 %v1748
          %v1829 = vunpack.c.l.b16 %v1749
          %v1830 = vunpack.c.l.b16 %v1750
          %v1831 = vunpack.c.l.b16 %v1751
          %v1832 = vunpack.c.l.b16 %v1752
          %v1833 = vunpack.c.l.b16 %v1753
          %v1834 = vunpack.c.l.b16 %v1754
          %v1835 = vunpack.c.l.b16 %v1755
          %v1836 = vunpack.c.l.b16 %v1756
          %v1837 = vunpack.c.l.b16 %v1757
          %v1838 = vunpack.c.l.b16 %v1758
          %v1839 = vunpack.c.l.b16 %v1759
          %v1840 = vunpack.c.l.b16 %v1760
          %v1841 = vunpack.c.l.b16 %v1761
          %v1842 = vunpack.c.l.b16 %v1762
          %v1843 = vunpack.c.l.b16 %v1763
          %v1844 = vpack.c.b16 %v1829, %v1828
          %v1845 = vpack.c.b16 %v1831, %v1830
          %v1846 = vpack.c.b16 %v1833, %v1832
          %v1847 = vpack.c.b16 %v1835, %v1834
          %v1848 = vpack.c.b16 %v1837, %v1836
          %v1849 = vpack.c.b16 %v1839, %v1838
          %v1850 = vpack.c.b16 %v1841, %v1840
          %v1851 = vpack.c.b16 %v1843, %v1842
          %v1861 = vperm.slane %v696, 0
          %v1895 = vunpack.c.l.b16 %v664
          %v1896 = vunpack.c.l.b16 %v665
          %v1897 = vunpack.c.l.b16 %v666
          %v1898 = vunpack.c.l.b16 %v667
          %v1899 = vunpack.c.l.b16 %v668
          %v1900 = vunpack.c.l.b16 %v669
          %v1901 = vunpack.c.l.b16 %v670
          %v1902 = vunpack.c.l.b16 %v671
          %v1903 = vunpack.c.l.b16 %v672
          %v1904 = vunpack.c.l.b16 %v673
          %v1905 = vunpack.c.l.b16 %v674
          %v1906 = vunpack.c.l.b16 %v675
          %v1907 = vunpack.c.l.b16 %v676
          %v1908 = vunpack.c.l.b16 %v677
          %v1909 = vunpack.c.l.b16 %v678
          %v1910 = vunpack.c.l.b16 %v679
          %v1911 = vunpack.c.l.b16 %v680
          %v1912 = vunpack.c.l.b16 %v681
          %v1913 = vunpack.c.l.b16 %v682
          %v1914 = vunpack.c.l.b16 %v683
          %v1915 = vunpack.c.l.b16 %v684
          %v1916 = vunpack.c.l.b16 %v685
          %v1917 = vunpack.c.l.b16 %v686
          %v1918 = vunpack.c.l.b16 %v687
          %v1919 = vunpack.c.l.b16 %v688
          %v1920 = vunpack.c.l.b16 %v689
          %v1921 = vunpack.c.l.b16 %v690
          %v1922 = vunpack.c.l.b16 %v691
          %v1923 = vunpack.c.l.b16 %v692
          %v1924 = vunpack.c.l.b16 %v693
          %v1925 = vunpack.c.l.b16 %v694
          %v1926 = vunpack.c.l.b16 %v695
          %v1927 = vpack.c.b16 %v1896, %v1895
          %v1928 = vpack.c.b16 %v1898, %v1897
          %v1929 = vpack.c.b16 %v1900, %v1899
          %v1930 = vpack.c.b16 %v1902, %v1901
          %v1931 = vpack.c.b16 %v1904, %v1903
          %v1932 = vpack.c.b16 %v1906, %v1905
          %v1933 = vpack.c.b16 %v1908, %v1907
          %v1934 = vpack.c.b16 %v1910, %v1909
          %v1935 = vpack.c.b16 %v1912, %v1911
          %v1936 = vpack.c.b16 %v1914, %v1913
          %v1937 = vpack.c.b16 %v1916, %v1915
          %v1938 = vpack.c.b16 %v1918, %v1917
          %v1939 = vpack.c.b16 %v1920, %v1919
          %v1940 = vpack.c.b16 %v1922, %v1921
          %v1941 = vpack.c.b16 %v1924, %v1923
          %v1942 = vpack.c.b16 %v1926, %v1925
          %1959 = vmatpush.bf16.msra.mxu0 %v1934
          %1960 = vmatpush.bf16.msra.mxu0 %v1933
          %1961 = vmatpush.bf16.msra.mxu0 %v1932
          %1962 = vmatpush.bf16.msra.mxu0 %v1931
          %1963 = vmatpush.bf16.msra.mxu0 %v1930
          %1964 = vmatpush.bf16.msra.mxu0 %v1929
          %1965 = vmatpush.bf16.msra.mxu0 %v1928
          %1966 = vmatpush.bf16.msra.mxu0 %v1927
          %1967 = vmatmul.bf16.gmra.mxu0 %v1796
          %v1968 = vpop.f32.mrf.mxu0
          %v1969 = vadd.f32 %v1861, %v1968
          %v1970 = vpop.f32.mrf.mxu0
          %v1971 = vadd.f32 %v1861, %v1970
          %1972 = vmatmul.bf16.gmra.mxu0 %v1797
          %v1973 = vpop.f32.mrf.mxu0
          %v1974 = vadd.f32 %v1861, %v1973
          %v1975 = vpop.f32.mrf.mxu0
          %v1976 = vadd.f32 %v1861, %v1975
          %1977 = vmatmul.bf16.gmra.mxu0 %v1798
          %v1978 = vpop.f32.mrf.mxu0
          %v1979 = vadd.f32 %v1861, %v1978
          %v1980 = vpop.f32.mrf.mxu0
          %v1981 = vadd.f32 %v1861, %v1980
          %1982 = vmatmul.bf16.gmra.mxu0 %v1799
          %v1983 = vpop.f32.mrf.mxu0
          %v1984 = vadd.f32 %v1861, %v1983
          %v1985 = vpop.f32.mrf.mxu0
          %v1986 = vadd.f32 %v1861, %v1985
          %1987 = vmatmul.bf16.gmra.mxu0 %v1800
          %v1988 = vpop.f32.mrf.mxu0
          %v1989 = vadd.f32 %v1861, %v1988
          %v1990 = vpop.f32.mrf.mxu0
          %v1991 = vadd.f32 %v1861, %v1990
          %1992 = vmatmul.bf16.gmra.mxu0 %v1801
          %v1993 = vpop.f32.mrf.mxu0
          %v1994 = vadd.f32 %v1861, %v1993
          %v1995 = vpop.f32.mrf.mxu0
          %v1996 = vadd.f32 %v1861, %v1995
          %1997 = vmatmul.bf16.gmra.mxu0 %v1802
          %v1998 = vpop.f32.mrf.mxu0
          %v1999 = vadd.f32 %v1861, %v1998
          %v2000 = vpop.f32.mrf.mxu0
          %v2001 = vadd.f32 %v1861, %v2000
          %2002 = vmatmul.bf16.gmra.mxu0 %v1803
          %v2003 = vpop.f32.mrf.mxu0
          %v2004 = vadd.f32 %v1861, %v2003
          %v2005 = vpop.f32.mrf.mxu0
          %v2006 = vadd.f32 %v1861, %v2005
          %2007 = vdwg.mxu0
          %2008 = vmatpush.bf16.msra.mxu0 %v1942
          %2009 = vmatpush.bf16.msra.mxu0 %v1941
          %2010 = vmatpush.bf16.msra.mxu0 %v1940
          %2011 = vmatpush.bf16.msra.mxu0 %v1939
          %2012 = vmatpush.bf16.msra.mxu0 %v1938
          %2013 = vmatpush.bf16.msra.mxu0 %v1937
          %2014 = vmatpush.bf16.msra.mxu0 %v1936
          %2015 = vmatpush.bf16.msra.mxu0 %v1935
          %2016 = vmatmul.bf16.gmra.mxu0 %v1844
          %v2017 = vpop.f32.mrf.mxu0
          %v2018 = vadd.f32 %v1969, %v2017
          %v2019 = vpop.f32.mrf.mxu0
          %v2020 = vadd.f32 %v1971, %v2019
          %2021 = vmatmul.bf16.gmra.mxu0 %v1845
          %v2022 = vpop.f32.mrf.mxu0
          %v2023 = vadd.f32 %v1974, %v2022
          %v2024 = vpop.f32.mrf.mxu0
          %v2025 = vadd.f32 %v1976, %v2024
          %2026 = vmatmul.bf16.gmra.mxu0 %v1846
          %v2027 = vpop.f32.mrf.mxu0
          %v2028 = vadd.f32 %v1979, %v2027
          %v2029 = vpop.f32.mrf.mxu0
          %v2030 = vadd.f32 %v1981, %v2029
          %2031 = vmatmul.bf16.gmra.mxu0 %v1847
          %v2032 = vpop.f32.mrf.mxu0
          %v2033 = vadd.f32 %v1984, %v2032
          %v2034 = vpop.f32.mrf.mxu0
          %v2035 = vadd.f32 %v1986, %v2034
          %2036 = vmatmul.bf16.gmra.mxu0 %v1848
          %v2037 = vpop.f32.mrf.mxu0
          %v2038 = vadd.f32 %v1989, %v2037
          %v2039 = vpop.f32.mrf.mxu0
          %v2040 = vadd.f32 %v1991, %v2039
          %2041 = vmatmul.bf16.gmra.mxu0 %v1849
          %v2042 = vpop.f32.mrf.mxu0
          %v2043 = vadd.f32 %v1994, %v2042
          %v2044 = vpop.f32.mrf.mxu0
          %v2045 = vadd.f32 %v1996, %v2044
          %2046 = vmatmul.bf16.gmra.mxu0 %v1850
          %v2047 = vpop.f32.mrf.mxu0
          %v2048 = vadd.f32 %v1999, %v2047
          %v2049 = vpop.f32.mrf.mxu0
          %v2050 = vadd.f32 %v2001, %v2049
          %2051 = vmatmul.bf16.gmra.mxu0 %v1851
          %v2052 = vpop.f32.mrf.mxu0
          %v2053 = vadd.f32 %v2004, %v2052
          %v2054 = vpop.f32.mrf.mxu0
          %v2055 = vadd.f32 %v2006, %v2054
          %2056 = vdwg.mxu0
          %v2057 = vmax.f32 %v2018, 0.0
          %v2058 = vmax.f32 %v2020, 0.0
          %v2059 = vmax.f32 %v2023, 0.0
          %v2060 = vmax.f32 %v2025, 0.0
          %v2061 = vmax.f32 %v2028, 0.0
          %v2062 = vmax.f32 %v2030, 0.0
          %v2063 = vmax.f32 %v2033, 0.0
          %v2064 = vmax.f32 %v2035, 0.0
          %v2065 = vmax.f32 %v2038, 0.0
          %v2066 = vmax.f32 %v2040, 0.0
          %v2067 = vmax.f32 %v2043, 0.0
          %v2068 = vmax.f32 %v2045, 0.0
          %v2069 = vmax.f32 %v2048, 0.0
          %v2070 = vmax.f32 %v2050, 0.0
          %v2071 = vmax.f32 %v2053, 0.0
          %v2072 = vmax.f32 %v2055, 0.0
          %v2073 = vpack.c.bf16 %v2057, %v2057
          %v2074 = vpack.c.bf16 %v2058, %v2058
          %v2075 = vpack.c.bf16 %v2059, %v2059
          %v2076 = vpack.c.bf16 %v2060, %v2060
          %v2077 = vpack.c.bf16 %v2061, %v2061
          %v2078 = vpack.c.bf16 %v2062, %v2062
          %v2079 = vpack.c.bf16 %v2063, %v2063
          %v2080 = vpack.c.bf16 %v2064, %v2064
          %v2081 = vpack.c.bf16 %v2065, %v2065
          %v2082 = vpack.c.bf16 %v2066, %v2066
          %v2083 = vpack.c.bf16 %v2067, %v2067
          %v2084 = vpack.c.bf16 %v2068, %v2068
          %v2085 = vpack.c.bf16 %v2069, %v2069
          %v2086 = vpack.c.bf16 %v2070, %v2070
          %v2087 = vpack.c.bf16 %v2071, %v2071
          %v2088 = vpack.c.bf16 %v2072, %v2072
          %s2089 = smul.addr %s1438, 4
          %s2090 = scalar_lea.vmem [#allocation3], %s2089
          %2091 = vst [vmem:[%s2090] sm:$0xf] %v2073
          %2092 = vst [vmem:[%s2090 + $0x4] sm:$0xf] %v2074
          %2093 = vst [vmem:[%s2090 + $0x8] sm:$0xf] %v2075
          %2094 = vst [vmem:[%s2090 + $0xc] sm:$0xf] %v2076
          %2095 = vst [vmem:[%s2090 + $0x10] sm:$0xf] %v2077
          %2096 = vst [vmem:[%s2090 + $0x14] sm:$0xf] %v2078
          %2097 = vst [vmem:[%s2090 + $0x18] sm:$0xf] %v2079
          %2098 = vst [vmem:[%s2090 + $0x1c] sm:$0xf] %v2080
          %2099 = vst [vmem:[%s2090 + $0x20] sm:$0xf] %v2081
          %2100 = vst [vmem:[%s2090 + $0x24] sm:$0xf] %v2082
          %2101 = vst [vmem:[%s2090 + $0x28] sm:$0xf] %v2083
          %2102 = vst [vmem:[%s2090 + $0x2c] sm:$0xf] %v2084
          %2103 = vst [vmem:[%s2090 + $0x30] sm:$0xf] %v2085
          %2104 = vst [vmem:[%s2090 + $0x34] sm:$0xf] %v2086
          %2105 = vst [vmem:[%s2090 + $0x38] sm:$0xf] %v2087
          %2106 = vst [vmem:[%s2090 + $0x3c] sm:$0xf] %v2088
        $region60: #{tpu_custom_call.1} parent=35 // pred_fallthru
          _
        %p2107 = scmp.eq.s32.totalorder %s27, 2
        // Predicated region
        $region61: #{tpu_custom_call.1} parent=35 // pred_check
          %p2108 = pneg %p2107
        $region62: #{tpu_custom_call.1} parent=35 // pred_check_branch
          %2110 = sbr.rel (%p2108) target = $region64
        $region63: #{tpu_custom_call.1} parent=35 // pred_region
          %v2111 = vld [vmem:[#allocation3] sm:$0xf]
          %v2112 = vld [vmem:[#allocation3 + $0x4] sm:$0xf]
          %v2113 = vld [vmem:[#allocation3 + $0x8] sm:$0xf]
          %v2114 = vld [vmem:[#allocation3 + $0xc] sm:$0xf]
          %v2115 = vld [vmem:[#allocation3 + $0x10] sm:$0xf]
          %v2116 = vld [vmem:[#allocation3 + $0x14] sm:$0xf]
          %v2117 = vld [vmem:[#allocation3 + $0x18] sm:$0xf]
          %v2118 = vld [vmem:[#allocation3 + $0x1c] sm:$0xf]
          %v2119 = vld [vmem:[#allocation3 + $0x20] sm:$0xf]
          %v2120 = vld [vmem:[#allocation3 + $0x24] sm:$0xf]
          %v2121 = vld [vmem:[#allocation3 + $0x28] sm:$0xf]
          %v2122 = vld [vmem:[#allocation3 + $0x2c] sm:$0xf]
          %v2123 = vld [vmem:[#allocation3 + $0x30] sm:$0xf]
          %v2124 = vld [vmem:[#allocation3 + $0x34] sm:$0xf]
          %v2125 = vld [vmem:[#allocation3 + $0x38] sm:$0xf]
          %v2126 = vld [vmem:[#allocation3 + $0x3c] sm:$0xf]
          %v2127 = vld [vmem:[#allocation3 + $0x40] sm:$0xf]
          %v2128 = vld [vmem:[#allocation3 + $0x44] sm:$0xf]
          %v2129 = vld [vmem:[#allocation3 + $0x48] sm:$0xf]
          %v2130 = vld [vmem:[#allocation3 + $0x4c] sm:$0xf]
          %v2131 = vld [vmem:[#allocation3 + $0x50] sm:$0xf]
          %v2132 = vld [vmem:[#allocation3 + $0x54] sm:$0xf]
          %v2133 = vld [vmem:[#allocation3 + $0x58] sm:$0xf]
          %v2134 = vld [vmem:[#allocation3 + $0x5c] sm:$0xf]
          %v2135 = vld [vmem:[#allocation3 + $0x60] sm:$0xf]
          %v2136 = vld [vmem:[#allocation3 + $0x64] sm:$0xf]
          %v2137 = vld [vmem:[#allocation3 + $0x68] sm:$0xf]
          %v2138 = vld [vmem:[#allocation3 + $0x6c] sm:$0xf]
          %v2139 = vld [vmem:[#allocation3 + $0x70] sm:$0xf]
          %v2140 = vld [vmem:[#allocation3 + $0x74] sm:$0xf]
          %v2141 = vld [vmem:[#allocation3 + $0x78] sm:$0xf]
          %v2142 = vld [vmem:[#allocation3 + $0x7c] sm:$0xf]
          %s2143 = sshra.s32 %s311, 3
          %s2144 = sand.u32 %s311, 7
          %s2145 = smul.addr %s2143, 4
          %s2146 = scalar_lea.vmem [#allocation3], %s2145
          %v2147 = vld [vmem:[%s2146] sm:$0xf]
          %v2148 = vld [vmem:[%s2146 + $0x4] sm:$0xf]
          %v2149 = vld [vmem:[%s2146 + $0x8] sm:$0xf]
          %v2150 = vld [vmem:[%s2146 + $0xc] sm:$0xf]
          %v2151 = vld [vmem:[%s2146 + $0x10] sm:$0xf]
          %v2152 = vld [vmem:[%s2146 + $0x14] sm:$0xf]
          %v2153 = vld [vmem:[%s2146 + $0x18] sm:$0xf]
          %v2154 = vld [vmem:[%s2146 + $0x1c] sm:$0xf]
          %v2155 = vld [vmem:[%s2146 + $0x20] sm:$0xf]
          %v2156 = vld [vmem:[%s2146 + $0x24] sm:$0xf]
          %v2157 = vld [vmem:[%s2146 + $0x28] sm:$0xf]
          %v2158 = vld [vmem:[%s2146 + $0x2c] sm:$0xf]
          %v2159 = vld [vmem:[%s2146 + $0x30] sm:$0xf]
          %v2160 = vld [vmem:[%s2146 + $0x34] sm:$0xf]
          %v2161 = vld [vmem:[%s2146 + $0x38] sm:$0xf]
          %v2162 = vld [vmem:[%s2146 + $0x3c] sm:$0xf]
          %v2179 = vunpack.c.l.b16 %v312
          %v2180 = vunpack.c.h.b16 %v312
          %v2181 = vunpack.c.l.b16 %v313
          %v2182 = vunpack.c.h.b16 %v313
          %v2183 = vunpack.c.l.b16 %v314
          %v2184 = vunpack.c.h.b16 %v314
          %v2185 = vunpack.c.l.b16 %v315
          %v2186 = vunpack.c.h.b16 %v315
          %v2187 = vunpack.c.l.b16 %v316
          %v2188 = vunpack.c.h.b16 %v316
          %v2189 = vunpack.c.l.b16 %v317
          %v2190 = vunpack.c.h.b16 %v317
          %v2191 = vunpack.c.l.b16 %v318
          %v2192 = vunpack.c.h.b16 %v318
          %v2193 = vunpack.c.l.b16 %v319
          %v2194 = vunpack.c.h.b16 %v319
          %v2195 = vunpack.c.l.b16 %v320
          %v2196 = vunpack.c.h.b16 %v320
          %v2197 = vunpack.c.l.b16 %v321
          %v2198 = vunpack.c.h.b16 %v321
          %v2199 = vunpack.c.l.b16 %v322
          %v2200 = vunpack.c.h.b16 %v322
          %v2201 = vunpack.c.l.b16 %v323
          %v2202 = vunpack.c.h.b16 %v323
          %v2203 = vunpack.c.l.b16 %v324
          %v2204 = vunpack.c.h.b16 %v324
          %v2205 = vunpack.c.l.b16 %v325
          %v2206 = vunpack.c.h.b16 %v325
          %v2207 = vunpack.c.l.b16 %v326
          %v2208 = vunpack.c.h.b16 %v326
          %v2209 = vunpack.c.l.b16 %v327
          %v2210 = vunpack.c.h.b16 %v327
          %v2211 = vpack.c.b16 %v2181, %v2179
          %v2212 = vpack.c.b16 %v2182, %v2180
          %v2213 = vpack.c.b16 %v2185, %v2183
          %v2214 = vpack.c.b16 %v2186, %v2184
          %v2215 = vpack.c.b16 %v2189, %v2187
          %v2216 = vpack.c.b16 %v2190, %v2188
          %v2217 = vpack.c.b16 %v2193, %v2191
          %v2218 = vpack.c.b16 %v2194, %v2192
          %v2219 = vpack.c.b16 %v2197, %v2195
          %v2220 = vpack.c.b16 %v2198, %v2196
          %v2221 = vpack.c.b16 %v2201, %v2199
          %v2222 = vpack.c.b16 %v2202, %v2200
          %v2223 = vpack.c.b16 %v2205, %v2203
          %v2224 = vpack.c.b16 %v2206, %v2204
          %v2225 = vpack.c.b16 %v2209, %v2207
          %v2226 = vpack.c.b16 %v2210, %v2208
          %v2275 = vunpack.c.l.b16 %v2111
          %v2276 = vunpack.c.l.b16 %v2112
          %v2277 = vunpack.c.l.b16 %v2113
          %v2278 = vunpack.c.l.b16 %v2114
          %v2279 = vunpack.c.l.b16 %v2115
          %v2280 = vunpack.c.l.b16 %v2116
          %v2281 = vunpack.c.l.b16 %v2117
          %v2282 = vunpack.c.l.b16 %v2118
          %v2283 = vunpack.c.l.b16 %v2119
          %v2284 = vunpack.c.l.b16 %v2120
          %v2285 = vunpack.c.l.b16 %v2121
          %v2286 = vunpack.c.l.b16 %v2122
          %v2287 = vunpack.c.l.b16 %v2123
          %v2288 = vunpack.c.l.b16 %v2124
          %v2289 = vunpack.c.l.b16 %v2125
          %v2290 = vunpack.c.l.b16 %v2126
          %v2291 = vunpack.c.l.b16 %v2127
          %v2292 = vunpack.c.l.b16 %v2128
          %v2293 = vunpack.c.l.b16 %v2129
          %v2294 = vunpack.c.l.b16 %v2130
          %v2295 = vunpack.c.l.b16 %v2131
          %v2296 = vunpack.c.l.b16 %v2132
          %v2297 = vunpack.c.l.b16 %v2133
          %v2298 = vunpack.c.l.b16 %v2134
          %v2299 = vunpack.c.l.b16 %v2135
          %v2300 = vunpack.c.l.b16 %v2136
          %v2301 = vunpack.c.l.b16 %v2137
          %v2302 = vunpack.c.l.b16 %v2138
          %v2303 = vunpack.c.l.b16 %v2139
          %v2304 = vunpack.c.l.b16 %v2140
          %v2305 = vunpack.c.l.b16 %v2141
          %v2306 = vunpack.c.l.b16 %v2142
          %v2307 = vpack.c.b16 %v2276, %v2275
          %v2308 = vpack.c.b16 %v2278, %v2277
          %v2309 = vpack.c.b16 %v2280, %v2279
          %v2310 = vpack.c.b16 %v2282, %v2281
          %v2311 = vpack.c.b16 %v2284, %v2283
          %v2312 = vpack.c.b16 %v2286, %v2285
          %v2313 = vpack.c.b16 %v2288, %v2287
          %v2314 = vpack.c.b16 %v2290, %v2289
          %v2315 = vpack.c.b16 %v2292, %v2291
          %v2316 = vpack.c.b16 %v2294, %v2293
          %v2317 = vpack.c.b16 %v2296, %v2295
          %v2318 = vpack.c.b16 %v2298, %v2297
          %v2319 = vpack.c.b16 %v2300, %v2299
          %v2320 = vpack.c.b16 %v2302, %v2301
          %v2321 = vpack.c.b16 %v2304, %v2303
          %v2322 = vpack.c.b16 %v2306, %v2305
          %2339 = vmatpush.bf16.msra.mxu0 %v2314
          %2340 = vmatpush.bf16.msra.mxu0 %v2313
          %2341 = vmatpush.bf16.msra.mxu0 %v2312
          %2342 = vmatpush.bf16.msra.mxu0 %v2311
          %2343 = vmatpush.bf16.msra.mxu0 %v2310
          %2344 = vmatpush.bf16.msra.mxu0 %v2309
          %2345 = vmatpush.bf16.msra.mxu0 %v2308
          %2346 = vmatpush.bf16.msra.mxu0 %v2307
          %2347 = vmatmul.bf16.gmra.mxu0 %v2211
          %v2348 = vpop.f32.mrf.mxu0
          %v2349 = vadd.f32 0.0, %v2348
          %v2350 = vpop.f32.mrf.mxu0
          %v2351 = vadd.f32 0.0, %v2350
          %2352 = vmatmul.bf16.gmra.mxu0 %v2213
          %v2353 = vpop.f32.mrf.mxu0
          %v2354 = vadd.f32 0.0, %v2353
          %v2355 = vpop.f32.mrf.mxu0
          %v2356 = vadd.f32 0.0, %v2355
          %2357 = vmatmul.bf16.gmra.mxu0 %v2215
          %v2358 = vpop.f32.mrf.mxu0
          %v2359 = vadd.f32 0.0, %v2358
          %v2360 = vpop.f32.mrf.mxu0
          %v2361 = vadd.f32 0.0, %v2360
          %2362 = vmatmul.bf16.gmra.mxu0 %v2217
          %v2363 = vpop.f32.mrf.mxu0
          %v2364 = vadd.f32 0.0, %v2363
          %v2365 = vpop.f32.mrf.mxu0
          %v2366 = vadd.f32 0.0, %v2365
          %2367 = vmatmul.bf16.gmra.mxu0 %v2219
          %v2368 = vpop.f32.mrf.mxu0
          %v2369 = vadd.f32 0.0, %v2368
          %v2370 = vpop.f32.mrf.mxu0
          %v2371 = vadd.f32 0.0, %v2370
          %2372 = vmatmul.bf16.gmra.mxu0 %v2221
          %v2373 = vpop.f32.mrf.mxu0
          %v2374 = vadd.f32 0.0, %v2373
          %v2375 = vpop.f32.mrf.mxu0
          %v2376 = vadd.f32 0.0, %v2375
          %2377 = vmatmul.bf16.gmra.mxu0 %v2223
          %v2378 = vpop.f32.mrf.mxu0
          %v2379 = vadd.f32 0.0, %v2378
          %v2380 = vpop.f32.mrf.mxu0
          %v2381 = vadd.f32 0.0, %v2380
          %2382 = vmatmul.bf16.gmra.mxu0 %v2225
          %v2383 = vpop.f32.mrf.mxu0
          %v2384 = vadd.f32 0.0, %v2383
          %v2385 = vpop.f32.mrf.mxu0
          %v2386 = vadd.f32 0.0, %v2385
          %2387 = vdwg.mxu0
          %2388 = vmatpush.bf16.msra.mxu0 %v2322
          %2389 = vmatpush.bf16.msra.mxu0 %v2321
          %2390 = vmatpush.bf16.msra.mxu0 %v2320
          %2391 = vmatpush.bf16.msra.mxu0 %v2319
          %2392 = vmatpush.bf16.msra.mxu0 %v2318
          %2393 = vmatpush.bf16.msra.mxu0 %v2317
          %2394 = vmatpush.bf16.msra.mxu0 %v2316
          %2395 = vmatpush.bf16.msra.mxu0 %v2315
          %2396 = vmatmul.bf16.gmra.mxu0 %v2212
          %v2397 = vpop.f32.mrf.mxu0
          %v2398 = vadd.f32 %v2349, %v2397
          %v2399 = vpop.f32.mrf.mxu0
          %v2400 = vadd.f32 %v2351, %v2399
          %2401 = vmatmul.bf16.gmra.mxu0 %v2214
          %v2402 = vpop.f32.mrf.mxu0
          %v2403 = vadd.f32 %v2354, %v2402
          %v2404 = vpop.f32.mrf.mxu0
          %v2405 = vadd.f32 %v2356, %v2404
          %2406 = vmatmul.bf16.gmra.mxu0 %v2216
          %v2407 = vpop.f32.mrf.mxu0
          %v2408 = vadd.f32 %v2359, %v2407
          %v2409 = vpop.f32.mrf.mxu0
          %v2410 = vadd.f32 %v2361, %v2409
          %2411 = vmatmul.bf16.gmra.mxu0 %v2218
          %v2412 = vpop.f32.mrf.mxu0
          %v2413 = vadd.f32 %v2364, %v2412
          %v2414 = vpop.f32.mrf.mxu0
          %v2415 = vadd.f32 %v2366, %v2414
          %2416 = vmatmul.bf16.gmra.mxu0 %v2220
          %v2417 = vpop.f32.mrf.mxu0
          %v2418 = vadd.f32 %v2369, %v2417
          %v2419 = vpop.f32.mrf.mxu0
          %v2420 = vadd.f32 %v2371, %v2419
          %2421 = vmatmul.bf16.gmra.mxu0 %v2222
          %v2422 = vpop.f32.mrf.mxu0
          %v2423 = vadd.f32 %v2374, %v2422
          %v2424 = vpop.f32.mrf.mxu0
          %v2425 = vadd.f32 %v2376, %v2424
          %2426 = vmatmul.bf16.gmra.mxu0 %v2224
          %v2427 = vpop.f32.mrf.mxu0
          %v2428 = vadd.f32 %v2379, %v2427
          %v2429 = vpop.f32.mrf.mxu0
          %v2430 = vadd.f32 %v2381, %v2429
          %2431 = vmatmul.bf16.gmra.mxu0 %v2226
          %v2432 = vpop.f32.mrf.mxu0
          %v2433 = vadd.f32 %v2384, %v2432
          %v2434 = vpop.f32.mrf.mxu0
          %v2435 = vadd.f32 %v2386, %v2434
          %2436 = vdwg.mxu0
          %v2437 = vmul.f32 %v2398, %v438
          %v2438 = vmul.f32 %v2400, %v453
          %v2439 = vmul.f32 %v2403, %v468
          %v2440 = vmul.f32 %v2405, %v483
          %v2441 = vmul.f32 %v2408, %v498
          %v2442 = vmul.f32 %v2410, %v513
          %v2443 = vmul.f32 %v2413, %v528
          %v2444 = vmul.f32 %v2415, %v543
          %v2445 = vmul.f32 %v2418, %v558
          %v2446 = vmul.f32 %v2420, %v573
          %v2447 = vmul.f32 %v2423, %v588
          %v2448 = vmul.f32 %v2425, %v603
          %v2449 = vmul.f32 %v2428, %v618
          %v2450 = vmul.f32 %v2430, %v633
          %v2451 = vmul.f32 %v2433, %v648
          %v2452 = vmul.f32 %v2435, %v663
          %v2453 = vpack.c.bf16 %v2437, %v2437
          %v2454 = vpack.c.bf16 %v2438, %v2438
          %v2455 = vpack.c.bf16 %v2439, %v2439
          %v2456 = vpack.c.bf16 %v2440, %v2440
          %v2457 = vpack.c.bf16 %v2441, %v2441
          %v2458 = vpack.c.bf16 %v2442, %v2442
          %v2459 = vpack.c.bf16 %v2443, %v2443
          %v2460 = vpack.c.bf16 %v2444, %v2444
          %v2461 = vpack.c.bf16 %v2445, %v2445
          %v2462 = vpack.c.bf16 %v2446, %v2446
          %v2463 = vpack.c.bf16 %v2447, %v2447
          %v2464 = vpack.c.bf16 %v2448, %v2448
          %v2465 = vpack.c.bf16 %v2449, %v2449
          %v2466 = vpack.c.bf16 %v2450, %v2450
          %v2467 = vpack.c.bf16 %v2451, %v2451
          %v2468 = vpack.c.bf16 %v2452, %v2452
          %v2485 = vunpack.c.l.b16 %v2147
          %v2486 = vunpack.c.l.b16 %v2148
          %v2487 = vunpack.c.l.b16 %v2149
          %v2488 = vunpack.c.l.b16 %v2150
          %v2489 = vunpack.c.l.b16 %v2151
          %v2490 = vunpack.c.l.b16 %v2152
          %v2491 = vunpack.c.l.b16 %v2153
          %v2492 = vunpack.c.l.b16 %v2154
          %v2493 = vunpack.c.l.b16 %v2155
          %v2494 = vunpack.c.l.b16 %v2156
          %v2495 = vunpack.c.l.b16 %v2157
          %v2496 = vunpack.c.l.b16 %v2158
          %v2497 = vunpack.c.l.b16 %v2159
          %v2498 = vunpack.c.l.b16 %v2160
          %v2499 = vunpack.c.l.b16 %v2161
          %v2500 = vunpack.c.l.b16 %v2162
          %v2501 = vpack.c.b16 %v2486, %v2485
          %v2502 = vpack.c.b16 %v2488, %v2487
          %v2503 = vpack.c.b16 %v2490, %v2489
          %v2504 = vpack.c.b16 %v2492, %v2491
          %v2505 = vpack.c.b16 %v2494, %v2493
          %v2506 = vpack.c.b16 %v2496, %v2495
          %v2507 = vpack.c.b16 %v2498, %v2497
          %v2508 = vpack.c.b16 %v2500, %v2499
          %v2533 = vunpack.c.l.b16 %v2453
          %v2534 = vunpack.c.l.b16 %v2454
          %v2535 = vunpack.c.l.b16 %v2455
          %v2536 = vunpack.c.l.b16 %v2456
          %v2537 = vunpack.c.l.b16 %v2457
          %v2538 = vunpack.c.l.b16 %v2458
          %v2539 = vunpack.c.l.b16 %v2459
          %v2540 = vunpack.c.l.b16 %v2460
          %v2541 = vunpack.c.l.b16 %v2461
          %v2542 = vunpack.c.l.b16 %v2462
          %v2543 = vunpack.c.l.b16 %v2463
          %v2544 = vunpack.c.l.b16 %v2464
          %v2545 = vunpack.c.l.b16 %v2465
          %v2546 = vunpack.c.l.b16 %v2466
          %v2547 = vunpack.c.l.b16 %v2467
          %v2548 = vunpack.c.l.b16 %v2468
          %v2549 = vpack.c.b16 %v2534, %v2533
          %v2550 = vpack.c.b16 %v2536, %v2535
          %v2551 = vpack.c.b16 %v2538, %v2537
          %v2552 = vpack.c.b16 %v2540, %v2539
          %v2553 = vpack.c.b16 %v2542, %v2541
          %v2554 = vpack.c.b16 %v2544, %v2543
          %v2555 = vpack.c.b16 %v2546, %v2545
          %v2556 = vpack.c.b16 %v2548, %v2547
          %v2566 = vperm.slane %v696, 0
          %v2600 = vunpack.c.l.b16 %v664
          %v2601 = vunpack.c.l.b16 %v665
          %v2602 = vunpack.c.l.b16 %v666
          %v2603 = vunpack.c.l.b16 %v667
          %v2604 = vunpack.c.l.b16 %v668
          %v2605 = vunpack.c.l.b16 %v669
          %v2606 = vunpack.c.l.b16 %v670
          %v2607 = vunpack.c.l.b16 %v671
          %v2608 = vunpack.c.l.b16 %v672
          %v2609 = vunpack.c.l.b16 %v673
          %v2610 = vunpack.c.l.b16 %v674
          %v2611 = vunpack.c.l.b16 %v675
          %v2612 = vunpack.c.l.b16 %v676
          %v2613 = vunpack.c.l.b16 %v677
          %v2614 = vunpack.c.l.b16 %v678
          %v2615 = vunpack.c.l.b16 %v679
          %v2616 = vunpack.c.l.b16 %v680
          %v2617 = vunpack.c.l.b16 %v681
          %v2618 = vunpack.c.l.b16 %v682
          %v2619 = vunpack.c.l.b16 %v683
          %v2620 = vunpack.c.l.b16 %v684
          %v2621 = vunpack.c.l.b16 %v685
          %v2622 = vunpack.c.l.b16 %v686
          %v2623 = vunpack.c.l.b16 %v687
          %v2624 = vunpack.c.l.b16 %v688
          %v2625 = vunpack.c.l.b16 %v689
          %v2626 = vunpack.c.l.b16 %v690
          %v2627 = vunpack.c.l.b16 %v691
          %v2628 = vunpack.c.l.b16 %v692
          %v2629 = vunpack.c.l.b16 %v693
          %v2630 = vunpack.c.l.b16 %v694
          %v2631 = vunpack.c.l.b16 %v695
          %v2632 = vpack.c.b16 %v2601, %v2600
          %v2633 = vpack.c.b16 %v2603, %v2602
          %v2634 = vpack.c.b16 %v2605, %v2604
          %v2635 = vpack.c.b16 %v2607, %v2606
          %v2636 = vpack.c.b16 %v2609, %v2608
          %v2637 = vpack.c.b16 %v2611, %v2610
          %v2638 = vpack.c.b16 %v2613, %v2612
          %v2639 = vpack.c.b16 %v2615, %v2614
          %v2640 = vpack.c.b16 %v2617, %v2616
          %v2641 = vpack.c.b16 %v2619, %v2618
          %v2642 = vpack.c.b16 %v2621, %v2620
          %v2643 = vpack.c.b16 %v2623, %v2622
          %v2644 = vpack.c.b16 %v2625, %v2624
          %v2645 = vpack.c.b16 %v2627, %v2626
          %v2646 = vpack.c.b16 %v2629, %v2628
          %v2647 = vpack.c.b16 %v2631, %v2630
          %2664 = vmatpush.bf16.msra.mxu0 %v2639
          %2665 = vmatpush.bf16.msra.mxu0 %v2638
          %2666 = vmatpush.bf16.msra.mxu0 %v2637
          %2667 = vmatpush.bf16.msra.mxu0 %v2636
          %2668 = vmatpush.bf16.msra.mxu0 %v2635
          %2669 = vmatpush.bf16.msra.mxu0 %v2634
          %2670 = vmatpush.bf16.msra.mxu0 %v2633
          %2671 = vmatpush.bf16.msra.mxu0 %v2632
          %2672 = vmatmul.bf16.gmra.mxu0 %v2501
          %v2673 = vpop.f32.mrf.mxu0
          %v2674 = vadd.f32 %v2566, %v2673
          %v2675 = vpop.f32.mrf.mxu0
          %v2676 = vadd.f32 %v2566, %v2675
          %2677 = vmatmul.bf16.gmra.mxu0 %v2502
          %v2678 = vpop.f32.mrf.mxu0
          %v2679 = vadd.f32 %v2566, %v2678
          %v2680 = vpop.f32.mrf.mxu0
          %v2681 = vadd.f32 %v2566, %v2680
          %2682 = vmatmul.bf16.gmra.mxu0 %v2503
          %v2683 = vpop.f32.mrf.mxu0
          %v2684 = vadd.f32 %v2566, %v2683
          %v2685 = vpop.f32.mrf.mxu0
          %v2686 = vadd.f32 %v2566, %v2685
          %2687 = vmatmul.bf16.gmra.mxu0 %v2504
          %v2688 = vpop.f32.mrf.mxu0
          %v2689 = vadd.f32 %v2566, %v2688
          %v2690 = vpop.f32.mrf.mxu0
          %v2691 = vadd.f32 %v2566, %v2690
          %2692 = vmatmul.bf16.gmra.mxu0 %v2505
          %v2693 = vpop.f32.mrf.mxu0
          %v2694 = vadd.f32 %v2566, %v2693
          %v2695 = vpop.f32.mrf.mxu0
          %v2696 = vadd.f32 %v2566, %v2695
          %2697 = vmatmul.bf16.gmra.mxu0 %v2506
          %v2698 = vpop.f32.mrf.mxu0
          %v2699 = vadd.f32 %v2566, %v2698
          %v2700 = vpop.f32.mrf.mxu0
          %v2701 = vadd.f32 %v2566, %v2700
          %2702 = vmatmul.bf16.gmra.mxu0 %v2507
          %v2703 = vpop.f32.mrf.mxu0
          %v2704 = vadd.f32 %v2566, %v2703
          %v2705 = vpop.f32.mrf.mxu0
          %v2706 = vadd.f32 %v2566, %v2705
          %2707 = vmatmul.bf16.gmra.mxu0 %v2508
          %v2708 = vpop.f32.mrf.mxu0
          %v2709 = vadd.f32 %v2566, %v2708
          %v2710 = vpop.f32.mrf.mxu0
          %v2711 = vadd.f32 %v2566, %v2710
          %2712 = vdwg.mxu0
          %2713 = vmatpush.bf16.msra.mxu0 %v2647
          %2714 = vmatpush.bf16.msra.mxu0 %v2646
          %2715 = vmatpush.bf16.msra.mxu0 %v2645
          %2716 = vmatpush.bf16.msra.mxu0 %v2644
          %2717 = vmatpush.bf16.msra.mxu0 %v2643
          %2718 = vmatpush.bf16.msra.mxu0 %v2642
          %2719 = vmatpush.bf16.msra.mxu0 %v2641
          %2720 = vmatpush.bf16.msra.mxu0 %v2640
          %2721 = vmatmul.bf16.gmra.mxu0 %v2549
          %v2722 = vpop.f32.mrf.mxu0
          %v2723 = vadd.f32 %v2674, %v2722
          %v2724 = vpop.f32.mrf.mxu0
          %v2725 = vadd.f32 %v2676, %v2724
          %2726 = vmatmul.bf16.gmra.mxu0 %v2550
          %v2727 = vpop.f32.mrf.mxu0
          %v2728 = vadd.f32 %v2679, %v2727
          %v2729 = vpop.f32.mrf.mxu0
          %v2730 = vadd.f32 %v2681, %v2729
          %2731 = vmatmul.bf16.gmra.mxu0 %v2551
          %v2732 = vpop.f32.mrf.mxu0
          %v2733 = vadd.f32 %v2684, %v2732
          %v2734 = vpop.f32.mrf.mxu0
          %v2735 = vadd.f32 %v2686, %v2734
          %2736 = vmatmul.bf16.gmra.mxu0 %v2552
          %v2737 = vpop.f32.mrf.mxu0
          %v2738 = vadd.f32 %v2689, %v2737
          %v2739 = vpop.f32.mrf.mxu0
          %v2740 = vadd.f32 %v2691, %v2739
          %2741 = vmatmul.bf16.gmra.mxu0 %v2553
          %v2742 = vpop.f32.mrf.mxu0
          %v2743 = vadd.f32 %v2694, %v2742
          %v2744 = vpop.f32.mrf.mxu0
          %v2745 = vadd.f32 %v2696, %v2744
          %2746 = vmatmul.bf16.gmra.mxu0 %v2554
          %v2747 = vpop.f32.mrf.mxu0
          %v2748 = vadd.f32 %v2699, %v2747
          %v2749 = vpop.f32.mrf.mxu0
          %v2750 = vadd.f32 %v2701, %v2749
          %2751 = vmatmul.bf16.gmra.mxu0 %v2555
          %v2752 = vpop.f32.mrf.mxu0
          %v2753 = vadd.f32 %v2704, %v2752
          %v2754 = vpop.f32.mrf.mxu0
          %v2755 = vadd.f32 %v2706, %v2754
          %2756 = vmatmul.bf16.gmra.mxu0 %v2556
          %v2757 = vpop.f32.mrf.mxu0
          %v2758 = vadd.f32 %v2709, %v2757
          %v2759 = vpop.f32.mrf.mxu0
          %v2760 = vadd.f32 %v2711, %v2759
          %2761 = vdwg.mxu0
          %s2762 = scalar_lea.vmem [#allocation12], %s311
          %2763 = vst [vmem:[%s2762] sm:$0xff] %v2723
          %2764 = vst [vmem:[%s2762 + $0x8] sm:$0xff] %v2725
          %2765 = vst [vmem:[%s2762 + $0x10] sm:$0xff] %v2728
          %2766 = vst [vmem:[%s2762 + $0x18] sm:$0xff] %v2730
          %2767 = vst [vmem:[%s2762 + $0x20] sm:$0xff] %v2733
          %2768 = vst [vmem:[%s2762 + $0x28] sm:$0xff] %v2735
          %2769 = vst [vmem:[%s2762 + $0x30] sm:$0xff] %v2738
          %2770 = vst [vmem:[%s2762 + $0x38] sm:$0xff] %v2740
          %2771 = vst [vmem:[%s2762 + $0x40] sm:$0xff] %v2743
          %2772 = vst [vmem:[%s2762 + $0x48] sm:$0xff] %v2745
          %2773 = vst [vmem:[%s2762 + $0x50] sm:$0xff] %v2748
          %2774 = vst [vmem:[%s2762 + $0x58] sm:$0xff] %v2750
          %2775 = vst [vmem:[%s2762 + $0x60] sm:$0xff] %v2753
          %2776 = vst [vmem:[%s2762 + $0x68] sm:$0xff] %v2755
          %2777 = vst [vmem:[%s2762 + $0x70] sm:$0xff] %v2758
          %2778 = vst [vmem:[%s2762 + $0x78] sm:$0xff] %v2760
        $region64: #{tpu_custom_call.1} parent=35 // pred_fallthru
          _
        // Predicated region
        $region65: #{tpu_custom_call.1} parent=35 // pred_check
          %p2779 = pneg %p147
        $region66: #{tpu_custom_call.1} parent=35 // pred_check_branch
          %2781 = sbr.rel (%p2779) target = $region68
        $region67: #{tpu_custom_call.1} parent=35 // pred_region
          %2783 = vsyncadd [#allocation6], 0
          %s2784 = sshll.u32 [#allocation12], 4
          %s2785 = int_to_ptr.vmem [resolvable:$true] %s2784
          %s2786 = sshll.u32 %s4, 4
          %s2787 = int_to_ptr.hbm [resolvable:$true] %s2786
          %2792 = dma.vmem_to_hbm [thread:$0]  %s2785, 4096, %s2787, [#allocation6], 128, 128, 8
        $region68: #{tpu_custom_call.1} parent=35 // pred_fallthru
          _
        // Predicated region
        $region69: #{tpu_custom_call.1} parent=35 // pred_check
          %p2793 = pneg %p147
        $region70: #{tpu_custom_call.1} parent=35 // pred_check_branch
          %2795 = sbr.rel (%p2793) target = $region72
        $region71: #{tpu_custom_call.1} parent=35 // pred_region
          %2797 = dma.done [#allocation6], 4096
        $region72: #{tpu_custom_call.1} parent=35 // pred_fallthru
          _
      $region36: #{tpu_custom_call.1} parent=5 // pred_fallthru
        _
      %p2798 = scmp.le.s32.totalorder 2, %s18
      // Predicated region
      $region73: #{tpu_custom_call.1} parent=5 // pred_check
        %p2799 = pneg %p2798
      $region74: #{tpu_custom_call.1} parent=5 // pred_check_branch
        %2801 = sbr.rel (%p2799) target = $region76
      $region75: #{tpu_custom_call.1} parent=5 // pred_region
        %s2802 = ssub.s32 %s18, 2
      $region76: #{tpu_custom_call.1} parent=5 // pred_fallthru
        _
    $region6: #{tpu_custom_call.1} parent=1 // loop_footer
      %s22 = sadd.s32 1, %s18
    $region7: #{tpu_custom_call.1} parent=1 // loop_footer_branch
      %17 = sbr.rel target = $region3
    $region8: #{tpu_custom_call.1} parent=1 // loop_exit
      _
    %2803 = vsyncpa [#allocation5], 1
    %s2804 = scalar_lea.sflag [#allocation5], 1
    %2805 = vsyncpa %s2804, 1
    %2806 = vsyncpa [#allocation8], 1
    %s2807 = scalar_lea.sflag [#allocation8], 1
    %2808 = vsyncpa %s2807, 1
    %2809 = vsyncpa [#allocation11], 1
    %s2810 = scalar_lea.sflag [#allocation11], 1
    %2811 = vsyncpa %s2810, 1
    %2812 = vsyncpa [#allocation6], 1
    %s2813 = scalar_lea.sflag [#allocation6], 1
    %2814 = vsyncpa %s2813, 1

</llo_original>
